<compile_context>
chip_gen: v7x
topology: tpu7x:2x2x1
jax: 0.10.0
libtpu: 0.0.40
codegen_flags: <defaults>
</compile_context>

<pallas_src>
import functools
import math

import jax
import jax.numpy as jnp
from jax import lax
from jax.experimental import pallas as pl
from jax.experimental.pallas import tpu as pltpu  # noqa: F401  (imported per convention)


def _lstm_kernel(x_ref, wih0_ref, b0_ref, wbig_ref, b1_ref, fcw_ref, fcb_ref,
                 out_ref, *, seq_len, batch, hidden):
    T, Bp, H = seq_len, batch, hidden

    # Hoisted layer-0 input projection (+ bias, folded once, outside the loop).
    gx0 = jnp.dot(x_ref[...], wih0_ref[...],
                  preferred_element_type=jnp.float32)            # (T*Bp, 4H) f32
    gx0 = gx0 + b0_ref[...]

    wbig = wbig_ref[...]          # (2H, 8H) bf16  == [[whh0, wih1], [0, whh1]]
    b1 = b1_ref[...]              # (1, 4H)  f32

    def gate_act(gates, c):
        # One full-width sigmoid over (Bp, 4H); g recovered via
        # tanh(x) = 2*sigmoid(2x) - 1 (g-gate columns were pre-scaled by 2).
        sg = jax.nn.sigmoid(gates)
        i = sg[:, 0 * H:1 * H]
        f = sg[:, 1 * H:2 * H]
        g = 2.0 * sg[:, 2 * H:3 * H] - 1.0
        o = sg[:, 3 * H:4 * H]
        c_new = f * c + i * g
        h_new = o * jnp.tanh(c_new)
        return h_new, c_new

    zeros = jnp.zeros((Bp, H), jnp.float32)
    c0, h1, c1 = zeros, zeros, zeros
    rec0 = jnp.zeros((Bp, 4 * H), jnp.float32)   # h0_{-1} @ whh0 == 0 (skip t=0 dot)

    # T is tiny and static: fully unrolled, all slices static / lane-aligned.
    for t in range(T):
        # Layer 0, step t (recurrent term comes from the previous fused matmul).
        gates0 = gx0[t * Bp:(t + 1) * Bp, :] + rec0
        h0, c0 = gate_act(gates0, c0)

        # Fused skewed matmul: one (Bp, 2H) x (2H, 8H) bf16 MXU push per step.
        hcat = jnp.concatenate([h0, h1], axis=-1).astype(jnp.bfloat16)   # (Bp, 2H)
        comb = jnp.dot(hcat, wbig, preferred_element_type=jnp.float32)   # (Bp, 8H)

        rec0 = comb[:, :4 * H]                 # layer-0 recurrent input, step t+1
        gates1 = comb[:, 4 * H:] + b1          # layer-1 gates, step t
        h1, c1 = gate_act(gates1, c1)

    # FC head folded in: lane-dense (Bp, 128) unmasked store.
    out_ref[...] = (jnp.dot(h1, fcw_ref[...], preferred_element_type=jnp.float32)
                    + fcb_ref[...])


def prep_kernel_params(params):
    """One-time (per-parameter-set) fusion / scaling / padding of the weights."""
    H = params["whh0_t"].shape[0]

    def scale_g(w):  # pre-scale g-gate columns by 2 so tanh(x) == 2*sigmoid(2x)-1
        return w.at[..., 2 * H:3 * H].multiply(2.0)

    wih0_s = scale_g(params["wih0_t"]).astype(jnp.bfloat16)      # (I, 4H)
    whh0_s = scale_g(params["whh0_t"])                            # (H, 4H)
    wih1_s = scale_g(params["wih1_t"])                            # (H, 4H)
    whh1_s = scale_g(params["whh1_t"])                            # (H, 4H)

    # Skewed fused recurrent weight: [[whh0, wih1], [0, whh1]]  -> (2H, 8H)
    w_big = jnp.concatenate(
        [jnp.concatenate([whh0_s, wih1_s], axis=1),
         jnp.concatenate([jnp.zeros_like(whh1_s), whh1_s], axis=1)],
        axis=0).astype(jnp.bfloat16)

    b0_s = scale_g(params["b0"])                                  # (1, 4H) f32
    b1_s = scale_g(params["b1"])                                  # (1, 4H) f32

    fcw_pad = jnp.zeros((H, 128), jnp.float32).at[:, :2].set(params["fcw_t"])
    fcb_pad = jnp.zeros((1, 128), jnp.float32).at[:, :2].set(params["fcb"])

    return {"wih0_s": wih0_s, "b0_s": b0_s, "w_big": w_big, "b1_s": b1_s,
            "fcw_pad": fcw_pad, "fcb_pad": fcb_pad}


@jax.jit
def lstm_forward(x, kp):
    """x: (B, T, I) float32 (batch_first). Returns (B, 2) float32."""
    B, T, I = x.shape
    H = kp["w_big"].shape[0] // 2
    Bp = max(8, -(-B // 8) * 8)    # pad batch to a full sublane group

    # Time-major, batch-padded, flattened so the layer-0 projection is one matmul.
    x_tm = jnp.transpose(x, (1, 0, 2))                         # (T, B, I)
    x_tm = jnp.pad(x_tm, ((0, 0), (0, Bp - B), (0, 0)))        # (T, Bp, I)
    x2d = x_tm.reshape(T * Bp, I).astype(jnp.bfloat16)

    kernel = functools.partial(_lstm_kernel, seq_len=T, batch=Bp, hidden=H)
    cost = pl.CostEstimate(
        flops=(2 * T * Bp * I * 4 * H            # hoisted input projection
               + 2 * T * Bp * (2 * H) * (8 * H)  # fused per-step matmul
               + 2 * Bp * H * 128),              # fc head
        transcendentals=2 * T * Bp * 5 * H,      # one 4H sigmoid + one H tanh / layer / step
        bytes_accessed=(2 * (T * Bp * I + I * 4 * H + 2 * H * 8 * H)
                        + 4 * (2 * 4 * H + H * 128 + 128 + Bp * 128)),
    )

    # No grid: everything is VMEM-resident, kernel body runs exactly once.
    out = pl.pallas_call(
        kernel,
        out_shape=jax.ShapeDtypeStruct((Bp, 128), jnp.float32),
        cost_estimate=cost,
    )(x2d, kp["wih0_s"], kp["b0_s"], kp["w_big"], kp["b1_s"],
      kp["fcw_pad"], kp["fcb_pad"])

    return out[:B, :2]


def lstm_ref(x, params):
    """Pure-JAX f32 reference (same math as nn.LSTM forward) for sanity checking."""
    B, T, I = x.shape
    H = params["whh0_t"].shape[0]
    x_tm = jnp.transpose(x, (1, 0, 2))

    def run_layer(xs, wih_t, whh_t, b):
        def step(carry, x_t):
            h, c = carry
            gates = x_t @ wih_t + h @ whh_t + b
            i = jax.nn.sigmoid(gates[:, 0 * H:1 * H])
            f = jax.nn.sigmoid(gates[:, 1 * H:2 * H])
            g = jnp.tanh(gates[:, 2 * H:3 * H])
            o = jax.nn.sigmoid(gates[:, 3 * H:4 * H])
            c_new = f * c + i * g
            h_new = o * jnp.tanh(c_new)
            return (h_new, c_new), h_new

        init = (jnp.zeros((B, H), jnp.float32), jnp.zeros((B, H), jnp.float32))
        _, hs = lax.scan(step, init, xs)
        return hs

    hs0 = run_layer(x_tm, params["wih0_t"], params["whh0_t"], params["b0"][0])
    hs1 = run_layer(hs0, params["wih1_t"], params["whh1_t"], params["b1"][0])
    ht = hs1[-1]
    return ht @ params["fcw_t"] + params["fcb"]


def init_params(key, input_size, hidden_dim):
    """Deterministic init mimicking PyTorch nn.LSTM / nn.Linear uniform bounds."""
    H, I = hidden_dim, input_size
    k = jax.random.split(key, 10)
    bound = 1.0 / math.sqrt(H)
    u = lambda kk, shp, b: jax.random.uniform(kk, shp, jnp.float32, -b, b)

    w_ih0 = u(k[0], (4 * H, I), bound)
    w_hh0 = u(k[1], (4 * H, H), bound)
    b_ih0 = u(k[2], (4 * H,), bound)
    b_hh0 = u(k[3], (4 * H,), bound)
    w_ih1 = u(k[4], (4 * H, H), bound)
    w_hh1 = u(k[5], (4 * H, H), bound)
    b_ih1 = u(k[6], (4 * H,), bound)
    b_hh1 = u(k[7], (4 * H,), bound)
    fc_w = u(k[8], (2, H), bound)
    fc_b = u(k[9], (2,), bound)

    return {
        "wih0_t": w_ih0.T,                        # (I, 4H)
        "whh0_t": w_hh0.T,                        # (H, 4H)
        "b0": (b_ih0 + b_hh0).reshape(1, 4 * H),
        "wih1_t": w_ih1.T,                        # (H, 4H)
        "whh1_t": w_hh1.T,                        # (H, 4H)
        "b1": (b_ih1 + b_hh1).reshape(1, 4 * H),
        "fcw_t": fc_w.T,                          # (H, 2)
        "fcb": fc_b.reshape(1, 2),
    }


if __name__ == "__main__":
    B, T, I, H = 2, 8, 16, 32

    key = jax.random.PRNGKey(0)
    k_param, k_x = jax.random.split(key)
    params = init_params(k_param, I, H)
    kparams = prep_kernel_params(params)        # one-time weight fusion / scaling / padding
    x = jax.random.normal(k_x, (B, T, I), dtype=jnp.float32)

    out = lstm_forward(x, kparams)
    out = jax.block_until_ready(out)

    ref = lstm_ref(x, params)
    assert out.shape == (B, 2), out.shape
    # bf16 matmul operands (f32 accumulation) vs pure-f32 reference -> relaxed tolerance.
    assert jnp.allclose(out, ref, atol=2e-2, rtol=2e-2), (
        f"max abs diff {jnp.max(jnp.abs(out - ref))}")

    print("KERNEL_OK")
</pallas_src>

<mosaic_0001>
module attributes {stable_mosaic.version = 11 : i64} {
  func.func @_lstm_kernel(%arg0: memref<64x16xbf16, #tpu.memory_space<vmem>>, %arg1: memref<16x128xbf16, #tpu.memory_space<vmem>>, %arg2: memref<1x128xf32, #tpu.memory_space<vmem>>, %arg3: memref<64x256xbf16, #tpu.memory_space<vmem>>, %arg4: memref<1x128xf32, #tpu.memory_space<vmem>>, %arg5: memref<32x128xf32, #tpu.memory_space<vmem>>, %arg6: memref<1x128xf32, #tpu.memory_space<vmem>>, %arg7: memref<8x128xf32, #tpu.memory_space<vmem>>) attributes {dimension_semantics = [], scalar_prefetch = 0 : i64, scratch_operands = 0 : i64, tpu.core_type = #tpu.core_type<tc>} {
    %c0 = arith.constant 0 : index
    %c0_0 = arith.constant 0 : index
    %0 = vector.load %arg0[%c0, %c0_0] : memref<64x16xbf16, #tpu.memory_space<vmem>>, vector<64x16xbf16>
    %c0_1 = arith.constant 0 : index
    %c0_2 = arith.constant 0 : index
    %1 = vector.load %arg1[%c0_1, %c0_2] : memref<16x128xbf16, #tpu.memory_space<vmem>>, vector<16x128xbf16>
    %cst = arith.constant dense<0.000000e+00> : vector<64x128xf32>
    %2 = tpu.matmul %0, %1, %cst {dimension_numbers = #tpu.dot_dimension_numbers<[1], [0], [0], [1], [0, 0, 1, 1], [], []>} : vector<64x16xbf16>, vector<16x128xbf16>, vector<64x128xf32> -> vector<64x128xf32>
    %c0_3 = arith.constant 0 : index
    %c0_4 = arith.constant 0 : index
    %3 = vector.load %arg2[%c0_3, %c0_4] : memref<1x128xf32, #tpu.memory_space<vmem>>, vector<1x128xf32>
    %4 = vector.broadcast %3 : vector<1x128xf32> to vector<64x128xf32>
    %5 = arith.addf %2, %4 : vector<64x128xf32>
    %c0_5 = arith.constant 0 : index
    %c0_6 = arith.constant 0 : index
    %6 = vector.load %arg3[%c0_5, %c0_6] : memref<64x256xbf16, #tpu.memory_space<vmem>>, vector<64x256xbf16>
    %c0_7 = arith.constant 0 : index
    %c0_8 = arith.constant 0 : index
    %7 = vector.load %arg4[%c0_7, %c0_8] : memref<1x128xf32, #tpu.memory_space<vmem>>, vector<1x128xf32>
    %cst_9 = arith.constant 0.000000e+00 : f32
    %8 = vector.broadcast %cst_9 : f32 to vector<8x32xf32>
    %cst_10 = arith.constant 0.000000e+00 : f32
    %9 = vector.broadcast %cst_10 : f32 to vector<8x128xf32>
    %10 = vector.extract_strided_slice %5 {offsets = [0, 0], sizes = [8, 128], strides = [1, 1]} : vector<64x128xf32> to vector<8x128xf32>
    %11 = arith.addf %10, %9 : vector<8x128xf32>
    %12 = arith.negf %11 : vector<8x128xf32>
    %13 = math.exp %12 : vector<8x128xf32>
    %cst_11 = arith.constant 1.000000e+00 : f32
    %14 = vector.broadcast %cst_11 : f32 to vector<8x128xf32>
    %15 = arith.addf %14, %13 : vector<8x128xf32>
    %16 = arith.divf %14, %15 : vector<8x128xf32>
    %17 = vector.extract_strided_slice %16 {offsets = [0, 0], sizes = [8, 32], strides = [1, 1]} : vector<8x128xf32> to vector<8x32xf32>
    %18 = vector.extract_strided_slice %16 {offsets = [0, 32], sizes = [8, 32], strides = [1, 1]} : vector<8x128xf32> to vector<8x32xf32>
    %19 = vector.extract_strided_slice %16 {offsets = [0, 64], sizes = [8, 32], strides = [1, 1]} : vector<8x128xf32> to vector<8x32xf32>
    %cst_12 = arith.constant 2.000000e+00 : f32
    %20 = vector.broadcast %cst_12 : f32 to vector<8x32xf32>
    %21 = arith.mulf %20, %19 : vector<8x32xf32>
    %cst_13 = arith.constant 1.000000e+00 : f32
    %22 = vector.broadcast %cst_13 : f32 to vector<8x32xf32>
    %23 = arith.subf %21, %22 : vector<8x32xf32>
    %24 = vector.extract_strided_slice %16 {offsets = [0, 96], sizes = [8, 32], strides = [1, 1]} : vector<8x128xf32> to vector<8x32xf32>
    %25 = arith.mulf %18, %8 : vector<8x32xf32>
    %26 = arith.mulf %17, %23 : vector<8x32xf32>
    %27 = arith.addf %25, %26 : vector<8x32xf32>
    %28 = math.tanh %27 : vector<8x32xf32>
    %29 = arith.mulf %24, %28 : vector<8x32xf32>
    %30 = tpu.concatenate %29, %8 in 1 : vector<8x32xf32>, vector<8x32xf32> -> vector<8x64xf32>
    %31 = arith.truncf %30 : vector<8x64xf32> to vector<8x64xbf16>
    %cst_14 = arith.constant dense<0.000000e+00> : vector<8x256xf32>
    %32 = tpu.matmul %31, %6, %cst_14 {dimension_numbers = #tpu.dot_dimension_numbers<[1], [0], [0], [1], [0, 0, 1, 1], [], []>} : vector<8x64xbf16>, vector<64x256xbf16>, vector<8x256xf32> -> vector<8x256xf32>
    %33 = vector.extract_strided_slice %32 {offsets = [0, 0], sizes = [8, 128], strides = [1, 1]} : vector<8x256xf32> to vector<8x128xf32>
    %34 = vector.extract_strided_slice %32 {offsets = [0, 128], sizes = [8, 128], strides = [1, 1]} : vector<8x256xf32> to vector<8x128xf32>
    %35 = vector.broadcast %7 : vector<1x128xf32> to vector<8x128xf32>
    %36 = arith.addf %34, %35 : vector<8x128xf32>
    %37 = arith.negf %36 : vector<8x128xf32>
    %38 = math.exp %37 : vector<8x128xf32>
    %cst_15 = arith.constant 1.000000e+00 : f32
    %39 = vector.broadcast %cst_15 : f32 to vector<8x128xf32>
    %40 = arith.addf %39, %38 : vector<8x128xf32>
    %41 = arith.divf %39, %40 : vector<8x128xf32>
    %42 = vector.extract_strided_slice %41 {offsets = [0, 0], sizes = [8, 32], strides = [1, 1]} : vector<8x128xf32> to vector<8x32xf32>
    %43 = vector.extract_strided_slice %41 {offsets = [0, 32], sizes = [8, 32], strides = [1, 1]} : vector<8x128xf32> to vector<8x32xf32>
    %44 = vector.extract_strided_slice %41 {offsets = [0, 64], sizes = [8, 32], strides = [1, 1]} : vector<8x128xf32> to vector<8x32xf32>
    %cst_16 = arith.constant 2.000000e+00 : f32
    %45 = vector.broadcast %cst_16 : f32 to vector<8x32xf32>
    %46 = arith.mulf %45, %44 : vector<8x32xf32>
    %cst_17 = arith.constant 1.000000e+00 : f32
    %47 = vector.broadcast %cst_17 : f32 to vector<8x32xf32>
    %48 = arith.subf %46, %47 : vector<8x32xf32>
    %49 = vector.extract_strided_slice %41 {offsets = [0, 96], sizes = [8, 32], strides = [1, 1]} : vector<8x128xf32> to vector<8x32xf32>
    %50 = arith.mulf %43, %8 : vector<8x32xf32>
    %51 = arith.mulf %42, %48 : vector<8x32xf32>
    %52 = arith.addf %50, %51 : vector<8x32xf32>
    %53 = math.tanh %52 : vector<8x32xf32>
    %54 = arith.mulf %49, %53 : vector<8x32xf32>
    %55 = vector.extract_strided_slice %5 {offsets = [8, 0], sizes = [8, 128], strides = [1, 1]} : vector<64x128xf32> to vector<8x128xf32>
    %56 = arith.addf %55, %33 : vector<8x128xf32>
    %57 = arith.negf %56 : vector<8x128xf32>
    %58 = math.exp %57 : vector<8x128xf32>
    %cst_18 = arith.constant 1.000000e+00 : f32
    %59 = vector.broadcast %cst_18 : f32 to vector<8x128xf32>
    %60 = arith.addf %59, %58 : vector<8x128xf32>
    %61 = arith.divf %59, %60 : vector<8x128xf32>
    %62 = vector.extract_strided_slice %61 {offsets = [0, 0], sizes = [8, 32], strides = [1, 1]} : vector<8x128xf32> to vector<8x32xf32>
    %63 = vector.extract_strided_slice %61 {offsets = [0, 32], sizes = [8, 32], strides = [1, 1]} : vector<8x128xf32> to vector<8x32xf32>
    %64 = vector.extract_strided_slice %61 {offsets = [0, 64], sizes = [8, 32], strides = [1, 1]} : vector<8x128xf32> to vector<8x32xf32>
    %cst_19 = arith.constant 2.000000e+00 : f32
    %65 = vector.broadcast %cst_19 : f32 to vector<8x32xf32>
    %66 = arith.mulf %65, %64 : vector<8x32xf32>
    %cst_20 = arith.constant 1.000000e+00 : f32
    %67 = vector.broadcast %cst_20 : f32 to vector<8x32xf32>
    %68 = arith.subf %66, %67 : vector<8x32xf32>
    %69 = vector.extract_strided_slice %61 {offsets = [0, 96], sizes = [8, 32], strides = [1, 1]} : vector<8x128xf32> to vector<8x32xf32>
    %70 = arith.mulf %63, %27 : vector<8x32xf32>
    %71 = arith.mulf %62, %68 : vector<8x32xf32>
    %72 = arith.addf %70, %71 : vector<8x32xf32>
    %73 = math.tanh %72 : vector<8x32xf32>
    %74 = arith.mulf %69, %73 : vector<8x32xf32>
    %75 = tpu.concatenate %74, %54 in 1 : vector<8x32xf32>, vector<8x32xf32> -> vector<8x64xf32>
    %76 = arith.truncf %75 : vector<8x64xf32> to vector<8x64xbf16>
    %cst_21 = arith.constant dense<0.000000e+00> : vector<8x256xf32>
    %77 = tpu.matmul %76, %6, %cst_21 {dimension_numbers = #tpu.dot_dimension_numbers<[1], [0], [0], [1], [0, 0, 1, 1], [], []>} : vector<8x64xbf16>, vector<64x256xbf16>, vector<8x256xf32> -> vector<8x256xf32>
    %78 = vector.extract_strided_slice %77 {offsets = [0, 0], sizes = [8, 128], strides = [1, 1]} : vector<8x256xf32> to vector<8x128xf32>
    %79 = vector.extract_strided_slice %77 {offsets = [0, 128], sizes = [8, 128], strides = [1, 1]} : vector<8x256xf32> to vector<8x128xf32>
    %80 = vector.broadcast %7 : vector<1x128xf32> to vector<8x128xf32>
    %81 = arith.addf %79, %80 : vector<8x128xf32>
    %82 = arith.negf %81 : vector<8x128xf32>
    %83 = math.exp %82 : vector<8x128xf32>
    %cst_22 = arith.constant 1.000000e+00 : f32
    %84 = vector.broadcast %cst_22 : f32 to vector<8x128xf32>
    %85 = arith.addf %84, %83 : vector<8x128xf32>
    %86 = arith.divf %84, %85 : vector<8x128xf32>
    %87 = vector.extract_strided_slice %86 {offsets = [0, 0], sizes = [8, 32], strides = [1, 1]} : vector<8x128xf32> to vector<8x32xf32>
    %88 = vector.extract_strided_slice %86 {offsets = [0, 32], sizes = [8, 32], strides = [1, 1]} : vector<8x128xf32> to vector<8x32xf32>
    %89 = vector.extract_strided_slice %86 {offsets = [0, 64], sizes = [8, 32], strides = [1, 1]} : vector<8x128xf32> to vector<8x32xf32>
    %cst_23 = arith.constant 2.000000e+00 : f32
    %90 = vector.broadcast %cst_23 : f32 to vector<8x32xf32>
    %91 = arith.mulf %90, %89 : vector<8x32xf32>
    %cst_24 = arith.constant 1.000000e+00 : f32
    %92 = vector.broadcast %cst_24 : f32 to vector<8x32xf32>
    %93 = arith.subf %91, %92 : vector<8x32xf32>
    %94 = vector.extract_strided_slice %86 {offsets = [0, 96], sizes = [8, 32], strides = [1, 1]} : vector<8x128xf32> to vector<8x32xf32>
    %95 = arith.mulf %88, %52 : vector<8x32xf32>
    %96 = arith.mulf %87, %93 : vector<8x32xf32>
    %97 = arith.addf %95, %96 : vector<8x32xf32>
    %98 = math.tanh %97 : vector<8x32xf32>
    %99 = arith.mulf %94, %98 : vector<8x32xf32>
    %100 = vector.extract_strided_slice %5 {offsets = [16, 0], sizes = [8, 128], strides = [1, 1]} : vector<64x128xf32> to vector<8x128xf32>
    %101 = arith.addf %100, %78 : vector<8x128xf32>
    %102 = arith.negf %101 : vector<8x128xf32>
    %103 = math.exp %102 : vector<8x128xf32>
    %cst_25 = arith.constant 1.000000e+00 : f32
    %104 = vector.broadcast %cst_25 : f32 to vector<8x128xf32>
    %105 = arith.addf %104, %103 : vector<8x128xf32>
    %106 = arith.divf %104, %105 : vector<8x128xf32>
    %107 = vector.extract_strided_slice %106 {offsets = [0, 0], sizes = [8, 32], strides = [1, 1]} : vector<8x128xf32> to vector<8x32xf32>
    %108 = vector.extract_strided_slice %106 {offsets = [0, 32], sizes = [8, 32], strides = [1, 1]} : vector<8x128xf32> to vector<8x32xf32>
    %109 = vector.extract_strided_slice %106 {offsets = [0, 64], sizes = [8, 32], strides = [1, 1]} : vector<8x128xf32> to vector<8x32xf32>
    %cst_26 = arith.constant 2.000000e+00 : f32
    %110 = vector.broadcast %cst_26 : f32 to vector<8x32xf32>
    %111 = arith.mulf %110, %109 : vector<8x32xf32>
    %cst_27 = arith.constant 1.000000e+00 : f32
    %112 = vector.broadcast %cst_27 : f32 to vector<8x32xf32>
    %113 = arith.subf %111, %112 : vector<8x32xf32>
    %114 = vector.extract_strided_slice %106 {offsets = [0, 96], sizes = [8, 32], strides = [1, 1]} : vector<8x128xf32> to vector<8x32xf32>
    %115 = arith.mulf %108, %72 : vector<8x32xf32>
    %116 = arith.mulf %107, %113 : vector<8x32xf32>
    %117 = arith.addf %115, %116 : vector<8x32xf32>
    %118 = math.tanh %117 : vector<8x32xf32>
    %119 = arith.mulf %114, %118 : vector<8x32xf32>
    %120 = tpu.concatenate %119, %99 in 1 : vector<8x32xf32>, vector<8x32xf32> -> vector<8x64xf32>
    %121 = arith.truncf %120 : vector<8x64xf32> to vector<8x64xbf16>
    %cst_28 = arith.constant dense<0.000000e+00> : vector<8x256xf32>
    %122 = tpu.matmul %121, %6, %cst_28 {dimension_numbers = #tpu.dot_dimension_numbers<[1], [0], [0], [1], [0, 0, 1, 1], [], []>} : vector<8x64xbf16>, vector<64x256xbf16>, vector<8x256xf32> -> vector<8x256xf32>
    %123 = vector.extract_strided_slice %122 {offsets = [0, 0], sizes = [8, 128], strides = [1, 1]} : vector<8x256xf32> to vector<8x128xf32>
    %124 = vector.extract_strided_slice %122 {offsets = [0, 128], sizes = [8, 128], strides = [1, 1]} : vector<8x256xf32> to vector<8x128xf32>
    %125 = vector.broadcast %7 : vector<1x128xf32> to vector<8x128xf32>
    %126 = arith.addf %124, %125 : vector<8x128xf32>
    %127 = arith.negf %126 : vector<8x128xf32>
    %128 = math.exp %127 : vector<8x128xf32>
    %cst_29 = arith.constant 1.000000e+00 : f32
    %129 = vector.broadcast %cst_29 : f32 to vector<8x128xf32>
    %130 = arith.addf %129, %128 : vector<8x128xf32>
    %131 = arith.divf %129, %130 : vector<8x128xf32>
    %132 = vector.extract_strided_slice %131 {offsets = [0, 0], sizes = [8, 32], strides = [1, 1]} : vector<8x128xf32> to vector<8x32xf32>
    %133 = vector.extract_strided_slice %131 {offsets = [0, 32], sizes = [8, 32], strides = [1, 1]} : vector<8x128xf32> to vector<8x32xf32>
    %134 = vector.extract_strided_slice %131 {offsets = [0, 64], sizes = [8, 32], strides = [1, 1]} : vector<8x128xf32> to vector<8x32xf32>
    %cst_30 = arith.constant 2.000000e+00 : f32
    %135 = vector.broadcast %cst_30 : f32 to vector<8x32xf32>
    %136 = arith.mulf %135, %134 : vector<8x32xf32>
    %cst_31 = arith.constant 1.000000e+00 : f32
    %137 = vector.broadcast %cst_31 : f32 to vector<8x32xf32>
    %138 = arith.subf %136, %137 : vector<8x32xf32>
    %139 = vector.extract_strided_slice %131 {offsets = [0, 96], sizes = [8, 32], strides = [1, 1]} : vector<8x128xf32> to vector<8x32xf32>
    %140 = arith.mulf %133, %97 : vector<8x32xf32>
    %141 = arith.mulf %132, %138 : vector<8x32xf32>
    %142 = arith.addf %140, %141 : vector<8x32xf32>
    %143 = math.tanh %142 : vector<8x32xf32>
    %144 = arith.mulf %139, %143 : vector<8x32xf32>
    %145 = vector.extract_strided_slice %5 {offsets = [24, 0], sizes = [8, 128], strides = [1, 1]} : vector<64x128xf32> to vector<8x128xf32>
    %146 = arith.addf %145, %123 : vector<8x128xf32>
    %147 = arith.negf %146 : vector<8x128xf32>
    %148 = math.exp %147 : vector<8x128xf32>
    %cst_32 = arith.constant 1.000000e+00 : f32
    %149 = vector.broadcast %cst_32 : f32 to vector<8x128xf32>
    %150 = arith.addf %149, %148 : vector<8x128xf32>
    %151 = arith.divf %149, %150 : vector<8x128xf32>
    %152 = vector.extract_strided_slice %151 {offsets = [0, 0], sizes = [8, 32], strides = [1, 1]} : vector<8x128xf32> to vector<8x32xf32>
    %153 = vector.extract_strided_slice %151 {offsets = [0, 32], sizes = [8, 32], strides = [1, 1]} : vector<8x128xf32> to vector<8x32xf32>
    %154 = vector.extract_strided_slice %151 {offsets = [0, 64], sizes = [8, 32], strides = [1, 1]} : vector<8x128xf32> to vector<8x32xf32>
    %cst_33 = arith.constant 2.000000e+00 : f32
    %155 = vector.broadcast %cst_33 : f32 to vector<8x32xf32>
    %156 = arith.mulf %155, %154 : vector<8x32xf32>
    %cst_34 = arith.constant 1.000000e+00 : f32
    %157 = vector.broadcast %cst_34 : f32 to vector<8x32xf32>
    %158 = arith.subf %156, %157 : vector<8x32xf32>
    %159 = vector.extract_strided_slice %151 {offsets = [0, 96], sizes = [8, 32], strides = [1, 1]} : vector<8x128xf32> to vector<8x32xf32>
    %160 = arith.mulf %153, %117 : vector<8x32xf32>
    %161 = arith.mulf %152, %158 : vector<8x32xf32>
    %162 = arith.addf %160, %161 : vector<8x32xf32>
    %163 = math.tanh %162 : vector<8x32xf32>
    %164 = arith.mulf %159, %163 : vector<8x32xf32>
    %165 = tpu.concatenate %164, %144 in 1 : vector<8x32xf32>, vector<8x32xf32> -> vector<8x64xf32>
    %166 = arith.truncf %165 : vector<8x64xf32> to vector<8x64xbf16>
    %cst_35 = arith.constant dense<0.000000e+00> : vector<8x256xf32>
    %167 = tpu.matmul %166, %6, %cst_35 {dimension_numbers = #tpu.dot_dimension_numbers<[1], [0], [0], [1], [0, 0, 1, 1], [], []>} : vector<8x64xbf16>, vector<64x256xbf16>, vector<8x256xf32> -> vector<8x256xf32>
    %168 = vector.extract_strided_slice %167 {offsets = [0, 0], sizes = [8, 128], strides = [1, 1]} : vector<8x256xf32> to vector<8x128xf32>
    %169 = vector.extract_strided_slice %167 {offsets = [0, 128], sizes = [8, 128], strides = [1, 1]} : vector<8x256xf32> to vector<8x128xf32>
    %170 = vector.broadcast %7 : vector<1x128xf32> to vector<8x128xf32>
    %171 = arith.addf %169, %170 : vector<8x128xf32>
    %172 = arith.negf %171 : vector<8x128xf32>
    %173 = math.exp %172 : vector<8x128xf32>
    %cst_36 = arith.constant 1.000000e+00 : f32
    %174 = vector.broadcast %cst_36 : f32 to vector<8x128xf32>
    %175 = arith.addf %174, %173 : vector<8x128xf32>
    %176 = arith.divf %174, %175 : vector<8x128xf32>
    %177 = vector.extract_strided_slice %176 {offsets = [0, 0], sizes = [8, 32], strides = [1, 1]} : vector<8x128xf32> to vector<8x32xf32>
    %178 = vector.extract_strided_slice %176 {offsets = [0, 32], sizes = [8, 32], strides = [1, 1]} : vector<8x128xf32> to vector<8x32xf32>
    %179 = vector.extract_strided_slice %176 {offsets = [0, 64], sizes = [8, 32], strides = [1, 1]} : vector<8x128xf32> to vector<8x32xf32>
    %cst_37 = arith.constant 2.000000e+00 : f32
    %180 = vector.broadcast %cst_37 : f32 to vector<8x32xf32>
    %181 = arith.mulf %180, %179 : vector<8x32xf32>
    %cst_38 = arith.constant 1.000000e+00 : f32
    %182 = vector.broadcast %cst_38 : f32 to vector<8x32xf32>
    %183 = arith.subf %181, %182 : vector<8x32xf32>
    %184 = vector.extract_strided_slice %176 {offsets = [0, 96], sizes = [8, 32], strides = [1, 1]} : vector<8x128xf32> to vector<8x32xf32>
    %185 = arith.mulf %178, %142 : vector<8x32xf32>
    %186 = arith.mulf %177, %183 : vector<8x32xf32>
    %187 = arith.addf %185, %186 : vector<8x32xf32>
    %188 = math.tanh %187 : vector<8x32xf32>
    %189 = arith.mulf %184, %188 : vector<8x32xf32>
    %190 = vector.extract_strided_slice %5 {offsets = [32, 0], sizes = [8, 128], strides = [1, 1]} : vector<64x128xf32> to vector<8x128xf32>
    %191 = arith.addf %190, %168 : vector<8x128xf32>
    %192 = arith.negf %191 : vector<8x128xf32>
    %193 = math.exp %192 : vector<8x128xf32>
    %cst_39 = arith.constant 1.000000e+00 : f32
    %194 = vector.broadcast %cst_39 : f32 to vector<8x128xf32>
    %195 = arith.addf %194, %193 : vector<8x128xf32>
    %196 = arith.divf %194, %195 : vector<8x128xf32>
    %197 = vector.extract_strided_slice %196 {offsets = [0, 0], sizes = [8, 32], strides = [1, 1]} : vector<8x128xf32> to vector<8x32xf32>
    %198 = vector.extract_strided_slice %196 {offsets = [0, 32], sizes = [8, 32], strides = [1, 1]} : vector<8x128xf32> to vector<8x32xf32>
    %199 = vector.extract_strided_slice %196 {offsets = [0, 64], sizes = [8, 32], strides = [1, 1]} : vector<8x128xf32> to vector<8x32xf32>
    %cst_40 = arith.constant 2.000000e+00 : f32
    %200 = vector.broadcast %cst_40 : f32 to vector<8x32xf32>
    %201 = arith.mulf %200, %199 : vector<8x32xf32>
    %cst_41 = arith.constant 1.000000e+00 : f32
    %202 = vector.broadcast %cst_41 : f32 to vector<8x32xf32>
    %203 = arith.subf %201, %202 : vector<8x32xf32>
    %204 = vector.extract_strided_slice %196 {offsets = [0, 96], sizes = [8, 32], strides = [1, 1]} : vector<8x128xf32> to vector<8x32xf32>
    %205 = arith.mulf %198, %162 : vector<8x32xf32>
    %206 = arith.mulf %197, %203 : vector<8x32xf32>
    %207 = arith.addf %205, %206 : vector<8x32xf32>
    %208 = math.tanh %207 : vector<8x32xf32>
    %209 = arith.mulf %204, %208 : vector<8x32xf32>
    %210 = tpu.concatenate %209, %189 in 1 : vector<8x32xf32>, vector<8x32xf32> -> vector<8x64xf32>
    %211 = arith.truncf %210 : vector<8x64xf32> to vector<8x64xbf16>
    %cst_42 = arith.constant dense<0.000000e+00> : vector<8x256xf32>
    %212 = tpu.matmul %211, %6, %cst_42 {dimension_numbers = #tpu.dot_dimension_numbers<[1], [0], [0], [1], [0, 0, 1, 1], [], []>} : vector<8x64xbf16>, vector<64x256xbf16>, vector<8x256xf32> -> vector<8x256xf32>
    %213 = vector.extract_strided_slice %212 {offsets = [0, 0], sizes = [8, 128], strides = [1, 1]} : vector<8x256xf32> to vector<8x128xf32>
    %214 = vector.extract_strided_slice %212 {offsets = [0, 128], sizes = [8, 128], strides = [1, 1]} : vector<8x256xf32> to vector<8x128xf32>
    %215 = vector.broadcast %7 : vector<1x128xf32> to vector<8x128xf32>
    %216 = arith.addf %214, %215 : vector<8x128xf32>
    %217 = arith.negf %216 : vector<8x128xf32>
    %218 = math.exp %217 : vector<8x128xf32>
    %cst_43 = arith.constant 1.000000e+00 : f32
    %219 = vector.broadcast %cst_43 : f32 to vector<8x128xf32>
    %220 = arith.addf %219, %218 : vector<8x128xf32>
    %221 = arith.divf %219, %220 : vector<8x128xf32>
    %222 = vector.extract_strided_slice %221 {offsets = [0, 0], sizes = [8, 32], strides = [1, 1]} : vector<8x128xf32> to vector<8x32xf32>
    %223 = vector.extract_strided_slice %221 {offsets = [0, 32], sizes = [8, 32], strides = [1, 1]} : vector<8x128xf32> to vector<8x32xf32>
    %224 = vector.extract_strided_slice %221 {offsets = [0, 64], sizes = [8, 32], strides = [1, 1]} : vector<8x128xf32> to vector<8x32xf32>
    %cst_44 = arith.constant 2.000000e+00 : f32
    %225 = vector.broadcast %cst_44 : f32 to vector<8x32xf32>
    %226 = arith.mulf %225, %224 : vector<8x32xf32>
    %cst_45 = arith.constant 1.000000e+00 : f32
    %227 = vector.broadcast %cst_45 : f32 to vector<8x32xf32>
    %228 = arith.subf %226, %227 : vector<8x32xf32>
    %229 = vector.extract_strided_slice %221 {offsets = [0, 96], sizes = [8, 32], strides = [1, 1]} : vector<8x128xf32> to vector<8x32xf32>
    %230 = arith.mulf %223, %187 : vector<8x32xf32>
    %231 = arith.mulf %222, %228 : vector<8x32xf32>
    %232 = arith.addf %230, %231 : vector<8x32xf32>
    %233 = math.tanh %232 : vector<8x32xf32>
    %234 = arith.mulf %229, %233 : vector<8x32xf32>
    %235 = vector.extract_strided_slice %5 {offsets = [40, 0], sizes = [8, 128], strides = [1, 1]} : vector<64x128xf32> to vector<8x128xf32>
    %236 = arith.addf %235, %213 : vector<8x128xf32>
    %237 = arith.negf %236 : vector<8x128xf32>
    %238 = math.exp %237 : vector<8x128xf32>
    %cst_46 = arith.constant 1.000000e+00 : f32
    %239 = vector.broadcast %cst_46 : f32 to vector<8x128xf32>
    %240 = arith.addf %239, %238 : vector<8x128xf32>
    %241 = arith.divf %239, %240 : vector<8x128xf32>
    %242 = vector.extract_strided_slice %241 {offsets = [0, 0], sizes = [8, 32], strides = [1, 1]} : vector<8x128xf32> to vector<8x32xf32>
    %243 = vector.extract_strided_slice %241 {offsets = [0, 32], sizes = [8, 32], strides = [1, 1]} : vector<8x128xf32> to vector<8x32xf32>
    %244 = vector.extract_strided_slice %241 {offsets = [0, 64], sizes = [8, 32], strides = [1, 1]} : vector<8x128xf32> to vector<8x32xf32>
    %cst_47 = arith.constant 2.000000e+00 : f32
    %245 = vector.broadcast %cst_47 : f32 to vector<8x32xf32>
    %246 = arith.mulf %245, %244 : vector<8x32xf32>
    %cst_48 = arith.constant 1.000000e+00 : f32
    %247 = vector.broadcast %cst_48 : f32 to vector<8x32xf32>
    %248 = arith.subf %246, %247 : vector<8x32xf32>
    %249 = vector.extract_strided_slice %241 {offsets = [0, 96], sizes = [8, 32], strides = [1, 1]} : vector<8x128xf32> to vector<8x32xf32>
    %250 = arith.mulf %243, %207 : vector<8x32xf32>
    %251 = arith.mulf %242, %248 : vector<8x32xf32>
    %252 = arith.addf %250, %251 : vector<8x32xf32>
    %253 = math.tanh %252 : vector<8x32xf32>
    %254 = arith.mulf %249, %253 : vector<8x32xf32>
    %255 = tpu.concatenate %254, %234 in 1 : vector<8x32xf32>, vector<8x32xf32> -> vector<8x64xf32>
    %256 = arith.truncf %255 : vector<8x64xf32> to vector<8x64xbf16>
    %cst_49 = arith.constant dense<0.000000e+00> : vector<8x256xf32>
    %257 = tpu.matmul %256, %6, %cst_49 {dimension_numbers = #tpu.dot_dimension_numbers<[1], [0], [0], [1], [0, 0, 1, 1], [], []>} : vector<8x64xbf16>, vector<64x256xbf16>, vector<8x256xf32> -> vector<8x256xf32>
    %258 = vector.extract_strided_slice %257 {offsets = [0, 0], sizes = [8, 128], strides = [1, 1]} : vector<8x256xf32> to vector<8x128xf32>
    %259 = vector.extract_strided_slice %257 {offsets = [0, 128], sizes = [8, 128], strides = [1, 1]} : vector<8x256xf32> to vector<8x128xf32>
    %260 = vector.broadcast %7 : vector<1x128xf32> to vector<8x128xf32>
    %261 = arith.addf %259, %260 : vector<8x128xf32>
    %262 = arith.negf %261 : vector<8x128xf32>
    %263 = math.exp %262 : vector<8x128xf32>
    %cst_50 = arith.constant 1.000000e+00 : f32
    %264 = vector.broadcast %cst_50 : f32 to vector<8x128xf32>
    %265 = arith.addf %264, %263 : vector<8x128xf32>
    %266 = arith.divf %264, %265 : vector<8x128xf32>
    %267 = vector.extract_strided_slice %266 {offsets = [0, 0], sizes = [8, 32], strides = [1, 1]} : vector<8x128xf32> to vector<8x32xf32>
    %268 = vector.extract_strided_slice %266 {offsets = [0, 32], sizes = [8, 32], strides = [1, 1]} : vector<8x128xf32> to vector<8x32xf32>
    %269 = vector.extract_strided_slice %266 {offsets = [0, 64], sizes = [8, 32], strides = [1, 1]} : vector<8x128xf32> to vector<8x32xf32>
    %cst_51 = arith.constant 2.000000e+00 : f32
    %270 = vector.broadcast %cst_51 : f32 to vector<8x32xf32>
    %271 = arith.mulf %270, %269 : vector<8x32xf32>
    %cst_52 = arith.constant 1.000000e+00 : f32
    %272 = vector.broadcast %cst_52 : f32 to vector<8x32xf32>
    %273 = arith.subf %271, %272 : vector<8x32xf32>
    %274 = vector.extract_strided_slice %266 {offsets = [0, 96], sizes = [8, 32], strides = [1, 1]} : vector<8x128xf32> to vector<8x32xf32>
    %275 = arith.mulf %268, %232 : vector<8x32xf32>
    %276 = arith.mulf %267, %273 : vector<8x32xf32>
    %277 = arith.addf %275, %276 : vector<8x32xf32>
    %278 = math.tanh %277 : vector<8x32xf32>
    %279 = arith.mulf %274, %278 : vector<8x32xf32>
    %280 = vector.extract_strided_slice %5 {offsets = [48, 0], sizes = [8, 128], strides = [1, 1]} : vector<64x128xf32> to vector<8x128xf32>
    %281 = arith.addf %280, %258 : vector<8x128xf32>
    %282 = arith.negf %281 : vector<8x128xf32>
    %283 = math.exp %282 : vector<8x128xf32>
    %cst_53 = arith.constant 1.000000e+00 : f32
    %284 = vector.broadcast %cst_53 : f32 to vector<8x128xf32>
    %285 = arith.addf %284, %283 : vector<8x128xf32>
    %286 = arith.divf %284, %285 : vector<8x128xf32>
    %287 = vector.extract_strided_slice %286 {offsets = [0, 0], sizes = [8, 32], strides = [1, 1]} : vector<8x128xf32> to vector<8x32xf32>
    %288 = vector.extract_strided_slice %286 {offsets = [0, 32], sizes = [8, 32], strides = [1, 1]} : vector<8x128xf32> to vector<8x32xf32>
    %289 = vector.extract_strided_slice %286 {offsets = [0, 64], sizes = [8, 32], strides = [1, 1]} : vector<8x128xf32> to vector<8x32xf32>
    %cst_54 = arith.constant 2.000000e+00 : f32
    %290 = vector.broadcast %cst_54 : f32 to vector<8x32xf32>
    %291 = arith.mulf %290, %289 : vector<8x32xf32>
    %cst_55 = arith.constant 1.000000e+00 : f32
    %292 = vector.broadcast %cst_55 : f32 to vector<8x32xf32>
    %293 = arith.subf %291, %292 : vector<8x32xf32>
    %294 = vector.extract_strided_slice %286 {offsets = [0, 96], sizes = [8, 32], strides = [1, 1]} : vector<8x128xf32> to vector<8x32xf32>
    %295 = arith.mulf %288, %252 : vector<8x32xf32>
    %296 = arith.mulf %287, %293 : vector<8x32xf32>
    %297 = arith.addf %295, %296 : vector<8x32xf32>
    %298 = math.tanh %297 : vector<8x32xf32>
    %299 = arith.mulf %294, %298 : vector<8x32xf32>
    %300 = tpu.concatenate %299, %279 in 1 : vector<8x32xf32>, vector<8x32xf32> -> vector<8x64xf32>
    %301 = arith.truncf %300 : vector<8x64xf32> to vector<8x64xbf16>
    %cst_56 = arith.constant dense<0.000000e+00> : vector<8x256xf32>
    %302 = tpu.matmul %301, %6, %cst_56 {dimension_numbers = #tpu.dot_dimension_numbers<[1], [0], [0], [1], [0, 0, 1, 1], [], []>} : vector<8x64xbf16>, vector<64x256xbf16>, vector<8x256xf32> -> vector<8x256xf32>
    %303 = vector.extract_strided_slice %302 {offsets = [0, 0], sizes = [8, 128], strides = [1, 1]} : vector<8x256xf32> to vector<8x128xf32>
    %304 = vector.extract_strided_slice %302 {offsets = [0, 128], sizes = [8, 128], strides = [1, 1]} : vector<8x256xf32> to vector<8x128xf32>
    %305 = vector.broadcast %7 : vector<1x128xf32> to vector<8x128xf32>
    %306 = arith.addf %304, %305 : vector<8x128xf32>
    %307 = arith.negf %306 : vector<8x128xf32>
    %308 = math.exp %307 : vector<8x128xf32>
    %cst_57 = arith.constant 1.000000e+00 : f32
    %309 = vector.broadcast %cst_57 : f32 to vector<8x128xf32>
    %310 = arith.addf %309, %308 : vector<8x128xf32>
    %311 = arith.divf %309, %310 : vector<8x128xf32>
    %312 = vector.extract_strided_slice %311 {offsets = [0, 0], sizes = [8, 32], strides = [1, 1]} : vector<8x128xf32> to vector<8x32xf32>
    %313 = vector.extract_strided_slice %311 {offsets = [0, 32], sizes = [8, 32], strides = [1, 1]} : vector<8x128xf32> to vector<8x32xf32>
    %314 = vector.extract_strided_slice %311 {offsets = [0, 64], sizes = [8, 32], strides = [1, 1]} : vector<8x128xf32> to vector<8x32xf32>
    %cst_58 = arith.constant 2.000000e+00 : f32
    %315 = vector.broadcast %cst_58 : f32 to vector<8x32xf32>
    %316 = arith.mulf %315, %314 : vector<8x32xf32>
    %cst_59 = arith.constant 1.000000e+00 : f32
    %317 = vector.broadcast %cst_59 : f32 to vector<8x32xf32>
    %318 = arith.subf %316, %317 : vector<8x32xf32>
    %319 = vector.extract_strided_slice %311 {offsets = [0, 96], sizes = [8, 32], strides = [1, 1]} : vector<8x128xf32> to vector<8x32xf32>
    %320 = arith.mulf %313, %277 : vector<8x32xf32>
    %321 = arith.mulf %312, %318 : vector<8x32xf32>
    %322 = arith.addf %320, %321 : vector<8x32xf32>
    %323 = math.tanh %322 : vector<8x32xf32>
    %324 = arith.mulf %319, %323 : vector<8x32xf32>
    %325 = vector.extract_strided_slice %5 {offsets = [56, 0], sizes = [8, 128], strides = [1, 1]} : vector<64x128xf32> to vector<8x128xf32>
    %326 = arith.addf %325, %303 : vector<8x128xf32>
    %327 = arith.negf %326 : vector<8x128xf32>
    %328 = math.exp %327 : vector<8x128xf32>
    %cst_60 = arith.constant 1.000000e+00 : f32
    %329 = vector.broadcast %cst_60 : f32 to vector<8x128xf32>
    %330 = arith.addf %329, %328 : vector<8x128xf32>
    %331 = arith.divf %329, %330 : vector<8x128xf32>
    %332 = vector.extract_strided_slice %331 {offsets = [0, 0], sizes = [8, 32], strides = [1, 1]} : vector<8x128xf32> to vector<8x32xf32>
    %333 = vector.extract_strided_slice %331 {offsets = [0, 32], sizes = [8, 32], strides = [1, 1]} : vector<8x128xf32> to vector<8x32xf32>
    %334 = vector.extract_strided_slice %331 {offsets = [0, 64], sizes = [8, 32], strides = [1, 1]} : vector<8x128xf32> to vector<8x32xf32>
    %cst_61 = arith.constant 2.000000e+00 : f32
    %335 = vector.broadcast %cst_61 : f32 to vector<8x32xf32>
    %336 = arith.mulf %335, %334 : vector<8x32xf32>
    %cst_62 = arith.constant 1.000000e+00 : f32
    %337 = vector.broadcast %cst_62 : f32 to vector<8x32xf32>
    %338 = arith.subf %336, %337 : vector<8x32xf32>
    %339 = vector.extract_strided_slice %331 {offsets = [0, 96], sizes = [8, 32], strides = [1, 1]} : vector<8x128xf32> to vector<8x32xf32>
    %340 = arith.mulf %333, %297 : vector<8x32xf32>
    %341 = arith.mulf %332, %338 : vector<8x32xf32>
    %342 = arith.addf %340, %341 : vector<8x32xf32>
    %343 = math.tanh %342 : vector<8x32xf32>
    %344 = arith.mulf %339, %343 : vector<8x32xf32>
    %345 = tpu.concatenate %344, %324 in 1 : vector<8x32xf32>, vector<8x32xf32> -> vector<8x64xf32>
    %346 = arith.truncf %345 : vector<8x64xf32> to vector<8x64xbf16>
    %cst_63 = arith.constant dense<0.000000e+00> : vector<8x256xf32>
    %347 = tpu.matmul %346, %6, %cst_63 {dimension_numbers = #tpu.dot_dimension_numbers<[1], [0], [0], [1], [0, 0, 1, 1], [], []>} : vector<8x64xbf16>, vector<64x256xbf16>, vector<8x256xf32> -> vector<8x256xf32>
    %348 = vector.extract_strided_slice %347 {offsets = [0, 128], sizes = [8, 128], strides = [1, 1]} : vector<8x256xf32> to vector<8x128xf32>
    %349 = vector.broadcast %7 : vector<1x128xf32> to vector<8x128xf32>
    %350 = arith.addf %348, %349 : vector<8x128xf32>
    %351 = arith.negf %350 : vector<8x128xf32>
    %352 = math.exp %351 : vector<8x128xf32>
    %cst_64 = arith.constant 1.000000e+00 : f32
    %353 = vector.broadcast %cst_64 : f32 to vector<8x128xf32>
    %354 = arith.addf %353, %352 : vector<8x128xf32>
    %355 = arith.divf %353, %354 : vector<8x128xf32>
    %356 = vector.extract_strided_slice %355 {offsets = [0, 0], sizes = [8, 32], strides = [1, 1]} : vector<8x128xf32> to vector<8x32xf32>
    %357 = vector.extract_strided_slice %355 {offsets = [0, 32], sizes = [8, 32], strides = [1, 1]} : vector<8x128xf32> to vector<8x32xf32>
    %358 = vector.extract_strided_slice %355 {offsets = [0, 64], sizes = [8, 32], strides = [1, 1]} : vector<8x128xf32> to vector<8x32xf32>
    %cst_65 = arith.constant 2.000000e+00 : f32
    %359 = vector.broadcast %cst_65 : f32 to vector<8x32xf32>
    %360 = arith.mulf %359, %358 : vector<8x32xf32>
    %cst_66 = arith.constant 1.000000e+00 : f32
    %361 = vector.broadcast %cst_66 : f32 to vector<8x32xf32>
    %362 = arith.subf %360, %361 : vector<8x32xf32>
    %363 = vector.extract_strided_slice %355 {offsets = [0, 96], sizes = [8, 32], strides = [1, 1]} : vector<8x128xf32> to vector<8x32xf32>
    %364 = arith.mulf %357, %322 : vector<8x32xf32>
    %365 = arith.mulf %356, %362 : vector<8x32xf32>
    %366 = arith.addf %364, %365 : vector<8x32xf32>
    %367 = math.tanh %366 : vector<8x32xf32>
    %368 = arith.mulf %363, %367 : vector<8x32xf32>
    %c0_67 = arith.constant 0 : index
    %c0_68 = arith.constant 0 : index
    %369 = vector.load %arg5[%c0_67, %c0_68] : memref<32x128xf32, #tpu.memory_space<vmem>>, vector<32x128xf32>
    %cst_69 = arith.constant dense<0.000000e+00> : vector<8x128xf32>
    %370 = tpu.matmul %368, %369, %cst_69 {dimension_numbers = #tpu.dot_dimension_numbers<[1], [0], [0], [1], [0, 0, 1, 1], [], []>} : vector<8x32xf32>, vector<32x128xf32>, vector<8x128xf32> -> vector<8x128xf32>
    %c0_70 = arith.constant 0 : index
    %c0_71 = arith.constant 0 : index
    %371 = vector.load %arg6[%c0_70, %c0_71] : memref<1x128xf32, #tpu.memory_space<vmem>>, vector<1x128xf32>
    %372 = vector.broadcast %371 : vector<1x128xf32> to vector<8x128xf32>
    %373 = arith.addf %370, %372 : vector<8x128xf32>
    %c0_72 = arith.constant 0 : index
    %c0_73 = arith.constant 0 : index
    %374 = vector.load %arg7[%c0_72, %c0_73] : memref<8x128xf32, #tpu.memory_space<vmem>>, vector<8x128xf32>
    tpu.vector_store %arg7[%c0_72, %c0_73], %373 {strides = array<i32>} : memref<8x128xf32, #tpu.memory_space<vmem>>, vector<8x128xf32>,
    return
  }
}

</mosaic_0001>

<llo_original>
// kernel: lstm_forward.1
$region0: #{lstm_forward.1}
  #allocation0 [shape = 'u32[]', space=smem, size = 0x4, offset = 0x4, fixed_abs, tag = 'smem constant byte address 0x4 - core index']
  #allocation1 [shape = 'u32[144,128]{1,0:T(1,128)}', space=vmem, size = 0x12000, scoped, tag = 'internal scratch']
  %s0 = inlined_call_operand.vmem [shape: bf16[64,16], index: 0, kind: input, shape index: {}]
  %s1 = inlined_call_operand.hbm [shape: bf16[16,128], index: 1, kind: input, shape index: {}]
  %s2 = inlined_call_operand.vmem [shape: f32[1,128], index: 2, kind: input, shape index: {}]
  %s3 = inlined_call_operand.vmem [shape: bf16[64,256], index: 3, kind: input, shape index: {}]
  %s4 = inlined_call_operand.vmem [shape: f32[1,128], index: 4, kind: input, shape index: {}]
  %s5 = inlined_call_operand.vmem [shape: f32[32,128], index: 5, kind: input, shape index: {}]
  %s6 = inlined_call_operand.hbm [shape: f32[1,128], index: 6, kind: input, shape index: {}]
  %s7 = inlined_call_operand.vmem [shape: f32[8,128], index: 7, kind: output, shape index: {}]
  %s8 = sld [smem:[#allocation0]]
  $region46: #{lstm_forward.1} parent=0
    _
  %s10 = ssub.s32 1, %s8
  %s11 = scalar_select 0, %s10, %s8
  $region1: #{lstm_forward.1} parent=0
    #allocation2 [shape = 'u8[4096]{0}', space=vmem, size = 0x1000, scoped, tag = 'input window, operand 1, single buffered']
    #allocation3 [shape = 's32[1]{0}', space=sflag, size = 0x4, scoped, tag = 'scoped memory for lstm_forward.1']
    #allocation4 [shape = 'u8[512]{0}', space=vmem, size = 0x400, scoped, tag = 'input window, operand 6, single buffered']
    #allocation5 [shape = 's32[1]{0}', space=sflag, size = 0x4, scoped, tag = 'scoped memory for lstm_forward.1']
    %12 = vsyncpa [#allocation3], 0
    %13 = vsyncpa [#allocation5], 0
    // Predicated region
    $region2: #{lstm_forward.1} parent=1 // pred_check
      _
    $region3: #{lstm_forward.1} parent=1 // pred_check_branch
      %15 = sbr.rel (0) target = $region5
    $region4: #{lstm_forward.1} parent=1 // pred_region
      _
    $region5: #{lstm_forward.1} parent=1 // pred_fallthru
      _
    // Predicated region
    $region6: #{lstm_forward.1} parent=1 // pred_check
      _
    $region7: #{lstm_forward.1} parent=1 // pred_check_branch
      %17 = sbr.rel (0) target = $region9
    $region8: #{lstm_forward.1} parent=1 // pred_region
      %s19 = ssub.s32 128, 128
      %20 = vsyncadd [#allocation3], %s19
      %s21 = sshll.u32 [#allocation2], 4
      %s22 = int_to_ptr.vmem [resolvable:$true] %s21
      %27 = dma.hbm_to_vmem [thread:$0]  %s1, 128, %s22, [#allocation3], 64, 64, 4
    $region9: #{lstm_forward.1} parent=1 // pred_fallthru
      _
    // Predicated region
    $region10: #{lstm_forward.1} parent=1 // pred_check
      _
    $region11: #{lstm_forward.1} parent=1 // pred_check_branch
      %29 = sbr.rel (0) target = $region13
    $region12: #{lstm_forward.1} parent=1 // pred_region
      _
    $region13: #{lstm_forward.1} parent=1 // pred_fallthru
      _
    // Predicated region
    $region14: #{lstm_forward.1} parent=1 // pred_check
      _
    $region15: #{lstm_forward.1} parent=1 // pred_check_branch
      %31 = sbr.rel (0) target = $region17
    $region16: #{lstm_forward.1} parent=1 // pred_region
      _
    $region17: #{lstm_forward.1} parent=1 // pred_fallthru
      _
    // Predicated region
    $region18: #{lstm_forward.1} parent=1 // pred_check
      _
    $region19: #{lstm_forward.1} parent=1 // pred_check_branch
      %33 = sbr.rel (0) target = $region21
    $region20: #{lstm_forward.1} parent=1 // pred_region
      _
    $region21: #{lstm_forward.1} parent=1 // pred_fallthru
      _
    // Predicated region
    $region22: #{lstm_forward.1} parent=1 // pred_check
      _
    $region23: #{lstm_forward.1} parent=1 // pred_check_branch
      %35 = sbr.rel (0) target = $region25
    $region24: #{lstm_forward.1} parent=1 // pred_region
      _
    $region25: #{lstm_forward.1} parent=1 // pred_fallthru
      _
    // Predicated region
    $region26: #{lstm_forward.1} parent=1 // pred_check
      _
    $region27: #{lstm_forward.1} parent=1 // pred_check_branch
      %37 = sbr.rel (0) target = $region29
    $region28: #{lstm_forward.1} parent=1 // pred_region
      %s39 = ssub.s32 16, 16
      %40 = vsyncadd [#allocation5], %s39
      %s42 = sshll.u32 [#allocation4], 4
      %s43 = int_to_ptr.vmem [resolvable:$true] %s42
      %45 = dma.hbm_to_vmem [thread:$0]  %s6, 16, %s43, [#allocation5]
    $region29: #{lstm_forward.1} parent=1 // pred_fallthru
      _
    // Predicated region
    $region30: #{lstm_forward.1} parent=1 // pred_check
      _
    $region31: #{lstm_forward.1} parent=1 // pred_check_branch
      %47 = sbr.rel (0) target = $region33
    $region32: #{lstm_forward.1} parent=1 // pred_region
      %48 = dma.done [#allocation3], 128
    $region33: #{lstm_forward.1} parent=1 // pred_fallthru
      _
    // Predicated region
    $region34: #{lstm_forward.1} parent=1 // pred_check
      _
    $region35: #{lstm_forward.1} parent=1 // pred_check_branch
      %50 = sbr.rel (0) target = $region37
    $region36: #{lstm_forward.1} parent=1 // pred_region
      %51 = dma.done [#allocation5], 16
    $region37: #{lstm_forward.1} parent=1 // pred_fallthru
      _
    %v53 = vld [vmem:[%s0] sm:$0xf]
    %v54 = vld [vmem:[%s0 + $0x4] sm:$0xf]
    %v55 = vld [vmem:[%s0 + $0x8] sm:$0xf]
    %v56 = vld [vmem:[%s0 + $0xc] sm:$0xf]
    %v57 = vld [vmem:[%s0 + $0x10] sm:$0xf]
    %v58 = vld [vmem:[%s0 + $0x14] sm:$0xf]
    %v59 = vld [vmem:[%s0 + $0x18] sm:$0xf]
    %v60 = vld [vmem:[%s0 + $0x1c] sm:$0xf]
    %v61 = vld [vmem:[#allocation2] sm:$0xf]
    %v62 = vld [vmem:[#allocation2 + $0x4] sm:$0xf]
    %v63 = vld [vmem:[%s2] sm:$0x1]
    %v65 = vlaneseq
    %v66 = vshrl.u32 %v65, 7
    %v67 = vsub.s32 0, %v66
    %v68 = vrot.slane %v63, %v67
    %v78 = vunpack.c.l.b16 %v53
    %v79 = vunpack.c.l.b16 %v54
    %v80 = vunpack.c.l.b16 %v55
    %v81 = vunpack.c.l.b16 %v56
    %v82 = vunpack.c.l.b16 %v57
    %v83 = vunpack.c.l.b16 %v58
    %v84 = vunpack.c.l.b16 %v59
    %v85 = vunpack.c.l.b16 %v60
    %v86 = vpack.c.b16 %v79, %v78
    %v87 = vpack.c.b16 %v81, %v80
    %v88 = vpack.c.b16 %v83, %v82
    %v89 = vpack.c.b16 %v85, %v84
    %v92 = vunpack.c.l.b16 %v61
    %v93 = vunpack.c.l.b16 %v62
    %v94 = vpack.c.b16 %v93, %v92
    %vm96 = vcmask 130048
    %v98 = vsel %vm96, %v86, 0
    %v101 = vsel %vm96, %v87, 0
    %v104 = vsel %vm96, %v88, 0
    %v107 = vsel %vm96, %v89, 0
    %109 = vmatprep.subr.bf16.mxu0 0
    %110 = vmatpush1.bf16.msra.mxu0 %v94
    %111 = vmatprep.subr.bf16.mxu0 0
    %112 = vmatpush1.bf16.msra.mxu0 0
    %113 = vmatprep.subr.bf16.mxu0 0
    %114 = vmatpush1.bf16.msra.mxu0 0
    %115 = vmatprep.subr.bf16.mxu0 0
    %116 = vmatpush1.bf16.msra.mxu0 0
    %117 = vmatprep.subr.bf16.mxu0 0
    %118 = vmatpush1.bf16.msra.mxu0 0
    %119 = vmatprep.subr.bf16.mxu0 0
    %120 = vmatpush1.bf16.msra.mxu0 0
    %121 = vmatprep.subr.bf16.mxu0 0
    %122 = vmatpush1.bf16.msra.mxu0 0
    %123 = vmatprep.subr.bf16.mxu0 0
    %124 = vmatpush1.bf16.msra.mxu0 0
    %125 = vmatprep.subr.bf16.mxu0 0
    %126 = vmatpush1.bf16.msra.mxu0 0
    %127 = vmatprep.subr.bf16.mxu0 0
    %128 = vmatpush1.bf16.msra.mxu0 0
    %129 = vmatprep.subr.bf16.mxu0 0
    %130 = vmatpush1.bf16.msra.mxu0 0
    %131 = vmatprep.subr.bf16.mxu0 0
    %132 = vmatpush1.bf16.msra.mxu0 0
    %133 = vmatprep.subr.bf16.mxu0 0
    %134 = vmatpush1.bf16.msra.mxu0 0
    %135 = vmatprep.subr.bf16.mxu0 0
    %136 = vmatpush1.bf16.msra.mxu0 0
    %137 = vmatprep.subr.bf16.mxu0 0
    %138 = vmatpush1.bf16.msra.mxu0 0
    %139 = vmatprep.subr.bf16.mxu0 0
    %140 = vmatpush1.bf16.msra.mxu0 0
    %141 = vmatprep.mubr.bf16.mxu0 0
    %142 = vmatmul.mubr.bf16.gmra.mrb[0].mxu0 %v98
    %v143 = vpop.f32.mrb[0].mxu0
    %v144 = vadd.f32 %v68, %v143
    %v145 = vpop.f32.mrb[0].mxu0
    %v146 = vpop.f32.mrb[0].mxu0
    %v147 = vadd.f32 %v68, %v146
    %v148 = vpop.f32.mrb[0].mxu0
    %149 = vmatprep.mubr.bf16.mxu0 0
    %150 = vmatmul.mubr.bf16.gmra.mrb[0].mxu0 %v101
    %v151 = vpop.f32.mrb[0].mxu0
    %v152 = vadd.f32 %v68, %v151
    %v153 = vpop.f32.mrb[0].mxu0
    %v154 = vpop.f32.mrb[0].mxu0
    %v155 = vadd.f32 %v68, %v154
    %v156 = vpop.f32.mrb[0].mxu0
    %157 = vmatprep.mubr.bf16.mxu0 0
    %158 = vmatmul.mubr.bf16.gmra.mrb[0].mxu0 %v104
    %v159 = vpop.f32.mrb[0].mxu0
    %v160 = vadd.f32 %v68, %v159
    %v161 = vpop.f32.mrb[0].mxu0
    %v162 = vpop.f32.mrb[0].mxu0
    %v163 = vadd.f32 %v68, %v162
    %v164 = vpop.f32.mrb[0].mxu0
    %165 = vmatprep.mubr.bf16.mxu0 0
    %166 = vmatmul.mubr.bf16.gmra.mrb[0].mxu0 %v107
    %v167 = vpop.f32.mrb[0].mxu0
    %v168 = vadd.f32 %v68, %v167
    %v169 = vpop.f32.mrb[0].mxu0
    %v170 = vpop.f32.mrb[0].mxu0
    %v171 = vadd.f32 %v68, %v170
    %v172 = vpop.f32.mrb[0].mxu0
    %173 = vdwg.mxu0
    %v174 = vld [vmem:[%s3] sm:$0xff]
    %v175 = vld [vmem:[%s3 + $0x8] sm:$0xff]
    %v176 = vld [vmem:[%s3 + $0x10] sm:$0xff]
    %v177 = vld [vmem:[%s3 + $0x18] sm:$0xff]
    %v178 = vld [vmem:[%s3 + $0x20] sm:$0xff]
    %v179 = vld [vmem:[%s3 + $0x28] sm:$0xff]
    %v180 = vld [vmem:[%s3 + $0x30] sm:$0xff]
    %v181 = vld [vmem:[%s3 + $0x38] sm:$0xff]
    %v182 = vld [vmem:[%s4] sm:$0x1]
    %v183 = vadd.f32 %v144, 0.0
    %v184 = vxor.u32 %v183, 2147483648
    %v185 = vmul.f32 %v184, 1.442695
    %v186 = vpow.pop %v185
    %v187 = vadd.f32 %v186, 1.0
    %v188 = vrcp.pop %v187
    %v189 = vmul.f32 1.0, %v188
    %v190 = vmul.f32 %v189, 2.0
    %v191 = vsub.f32 %v190, 1.0
    %v192 = vmul.f32 %v189, 0.0
    %194 = vrot.lane.b32.xlu0 %v191, 64
    %v195 = vpop.permute.xlu0 %194
    %v197 = vmul.f32 %v189, %v195
    %199 = vrot.lane.b32.xlu0 %v197, 32
    %v200 = vpop.permute.xlu0 %199
    %v202 = vadd.f32 %v192, %v200
    %v203 = vtanh.pop %v202
    %205 = vrot.lane.b32.xlu0 %v203, 64
    %v206 = vpop.permute.xlu0 %205
    %v208 = vmul.f32 %v189, %v206
    %210 = vrot.lane.b32.xlu0 %v208, 32
    %v211 = vpop.permute.xlu0 %210
    %vm213 = vcmask 261120
    %v214 = vsel %vm213, %v211, 0.0
    %v215 = vpack.c.bf16 %v214, %v214
    %v224 = vunpack.c.l.b16 %v174
    %v225 = vunpack.c.h.b16 %v174
    %v226 = vunpack.c.l.b16 %v175
    %v227 = vunpack.c.h.b16 %v175
    %v228 = vunpack.c.l.b16 %v176
    %v229 = vunpack.c.h.b16 %v176
    %v230 = vunpack.c.l.b16 %v177
    %v231 = vunpack.c.h.b16 %v177
    %v232 = vunpack.c.l.b16 %v178
    %v233 = vunpack.c.h.b16 %v178
    %v234 = vunpack.c.l.b16 %v179
    %v235 = vunpack.c.h.b16 %v179
    %v236 = vunpack.c.l.b16 %v180
    %v237 = vunpack.c.h.b16 %v180
    %v238 = vunpack.c.l.b16 %v181
    %v239 = vunpack.c.h.b16 %v181
    %v240 = vpack.c.b16 %v226, %v224
    %v241 = vpack.c.b16 %v227, %v225
    %v242 = vpack.c.b16 %v230, %v228
    %v243 = vpack.c.b16 %v231, %v229
    %v244 = vpack.c.b16 %v234, %v232
    %v245 = vpack.c.b16 %v235, %v233
    %v246 = vpack.c.b16 %v238, %v236
    %v247 = vpack.c.b16 %v239, %v237
    %vm256 = vcmask 523264
    %v258 = vsel %vm256, %v215, 0
    %260 = vmatprep.subr.bf16.mxu0 %v241
    %261 = vmatpush1.bf16.msra.mxu0 %v240
    %262 = vmatprep.subr.bf16.mxu0 %v243
    %263 = vmatpush1.bf16.msra.mxu0 %v242
    %264 = vmatprep.subr.bf16.mxu0 %v245
    %265 = vmatpush1.bf16.msra.mxu0 %v244
    %266 = vmatprep.subr.bf16.mxu0 %v247
    %267 = vmatpush1.bf16.msra.mxu0 %v246
    %268 = vmatprep.subr.bf16.mxu0 0
    %269 = vmatpush1.bf16.msra.mxu0 0
    %270 = vmatprep.subr.bf16.mxu0 0
    %271 = vmatpush1.bf16.msra.mxu0 0
    %272 = vmatprep.subr.bf16.mxu0 0
    %273 = vmatpush1.bf16.msra.mxu0 0
    %274 = vmatprep.subr.bf16.mxu0 0
    %275 = vmatpush1.bf16.msra.mxu0 0
    %276 = vmatprep.subr.bf16.mxu0 0
    %277 = vmatpush1.bf16.msra.mxu0 0
    %278 = vmatprep.subr.bf16.mxu0 0
    %279 = vmatpush1.bf16.msra.mxu0 0
    %280 = vmatprep.subr.bf16.mxu0 0
    %281 = vmatpush1.bf16.msra.mxu0 0
    %282 = vmatprep.subr.bf16.mxu0 0
    %283 = vmatpush1.bf16.msra.mxu0 0
    %284 = vmatprep.subr.bf16.mxu0 0
    %285 = vmatpush1.bf16.msra.mxu0 0
    %286 = vmatprep.subr.bf16.mxu0 0
    %287 = vmatpush1.bf16.msra.mxu0 0
    %288 = vmatprep.subr.bf16.mxu0 0
    %289 = vmatpush1.bf16.msra.mxu0 0
    %290 = vmatprep.subr.bf16.mxu0 0
    %291 = vmatpush1.bf16.msra.mxu0 0
    %292 = vmatprep.mubr.bf16.mxu0 0
    %293 = vmatmul.mubr.bf16.gmra.mrb[0].mxu0 %v258
    %v294 = vpop.f32.mrb[0].mxu0
    %v295 = vadd.f32 0.0, %v294
    %v296 = vpop.f32.mrb[0].mxu0
    %v297 = vadd.f32 0.0, %v296
    %v298 = vpop.f32.mrb[0].mxu0
    %v299 = vpop.f32.mrb[0].mxu0
    %300 = vdwg.mxu0
    %v302 = vlaneseq
    %v303 = vshrl.u32 %v302, 7
    %v304 = vsub.s32 0, %v303
    %v305 = vrot.slane %v182, %v304
    %v307 = vadd.f32 %v297, %v305
    %v308 = vxor.u32 %v307, 2147483648
    %v309 = vmul.f32 %v308, 1.442695
    %v310 = vpow.pop %v309
    %v311 = vadd.f32 %v310, 1.0
    %v312 = vrcp.pop %v311
    %v313 = vmul.f32 1.0, %v312
    %v314 = vmul.f32 %v313, 2.0
    %v315 = vsub.f32 %v314, 1.0
    %v316 = vmul.f32 %v313, 0.0
    %318 = vrot.lane.b32.xlu0 %v315, 64
    %v319 = vpop.permute.xlu0 %318
    %v321 = vmul.f32 %v313, %v319
    %323 = vrot.lane.b32.xlu0 %v321, 32
    %v324 = vpop.permute.xlu0 %323
    %v326 = vadd.f32 %v316, %v324
    %v327 = vtanh.pop %v326
    %329 = vrot.lane.b32.xlu0 %v327, 64
    %v330 = vpop.permute.xlu0 %329
    %v332 = vmul.f32 %v313, %v330
    %v333 = vadd.f32 %v147, %v295
    %v334 = vxor.u32 %v333, 2147483648
    %v335 = vmul.f32 %v334, 1.442695
    %v336 = vpow.pop %v335
    %v337 = vadd.f32 %v336, 1.0
    %v338 = vrcp.pop %v337
    %v339 = vmul.f32 1.0, %v338
    %v340 = vmul.f32 %v339, 2.0
    %v341 = vsub.f32 %v340, 1.0
    %v342 = vmul.f32 %v339, %v202
    %344 = vrot.lane.b32.xlu0 %v341, 64
    %v345 = vpop.permute.xlu0 %344
    %v347 = vmul.f32 %v339, %v345
    %349 = vrot.lane.b32.xlu0 %v347, 32
    %v350 = vpop.permute.xlu0 %349
    %v352 = vadd.f32 %v342, %v350
    %v353 = vtanh.pop %v352
    %355 = vrot.lane.b32.xlu0 %v353, 64
    %v356 = vpop.permute.xlu0 %355
    %v358 = vmul.f32 %v339, %v356
    %360 = vrot.lane.b32.xlu0 %v358, 32
    %v361 = vpop.permute.xlu0 %360
    %364 = vrot.lane.b32.xlu0 %v332, 64
    %v365 = vpop.permute.xlu0 %364
    %v367 = vsel %vm213, %v361, %v365
    %v368 = vpack.c.bf16 %v367, %v367
    %v370 = vsel %vm256, %v368, 0
    %372 = vmatprep.subr.bf16.mxu0 %v241
    %373 = vmatpush1.bf16.msra.mxu0 %v240
    %374 = vmatprep.subr.bf16.mxu0 %v243
    %375 = vmatpush1.bf16.msra.mxu0 %v242
    %376 = vmatprep.subr.bf16.mxu0 %v245
    %377 = vmatpush1.bf16.msra.mxu0 %v244
    %378 = vmatprep.subr.bf16.mxu0 %v247
    %379 = vmatpush1.bf16.msra.mxu0 %v246
    %380 = vmatprep.subr.bf16.mxu0 0
    %381 = vmatpush1.bf16.msra.mxu0 0
    %382 = vmatprep.subr.bf16.mxu0 0
    %383 = vmatpush1.bf16.msra.mxu0 0
    %384 = vmatprep.subr.bf16.mxu0 0
    %385 = vmatpush1.bf16.msra.mxu0 0
    %386 = vmatprep.subr.bf16.mxu0 0
    %387 = vmatpush1.bf16.msra.mxu0 0
    %388 = vmatprep.subr.bf16.mxu0 0
    %389 = vmatpush1.bf16.msra.mxu0 0
    %390 = vmatprep.subr.bf16.mxu0 0
    %391 = vmatpush1.bf16.msra.mxu0 0
    %392 = vmatprep.subr.bf16.mxu0 0
    %393 = vmatpush1.bf16.msra.mxu0 0
    %394 = vmatprep.subr.bf16.mxu0 0
    %395 = vmatpush1.bf16.msra.mxu0 0
    %396 = vmatprep.subr.bf16.mxu0 0
    %397 = vmatpush1.bf16.msra.mxu0 0
    %398 = vmatprep.subr.bf16.mxu0 0
    %399 = vmatpush1.bf16.msra.mxu0 0
    %400 = vmatprep.subr.bf16.mxu0 0
    %401 = vmatpush1.bf16.msra.mxu0 0
    %402 = vmatprep.subr.bf16.mxu0 0
    %403 = vmatpush1.bf16.msra.mxu0 0
    %404 = vmatprep.mubr.bf16.mxu0 0
    %405 = vmatmul.mubr.bf16.gmra.mrb[0].mxu0 %v370
    %v406 = vpop.f32.mrb[0].mxu0
    %v407 = vadd.f32 0.0, %v406
    %v408 = vpop.f32.mrb[0].mxu0
    %v409 = vadd.f32 0.0, %v408
    %v410 = vpop.f32.mrb[0].mxu0
    %v411 = vpop.f32.mrb[0].mxu0
    %412 = vdwg.mxu0
    %v413 = vadd.f32 %v409, %v305
    %v414 = vxor.u32 %v413, 2147483648
    %v415 = vmul.f32 %v414, 1.442695
    %v416 = vpow.pop %v415
    %v417 = vadd.f32 %v416, 1.0
    %v418 = vrcp.pop %v417
    %v419 = vmul.f32 1.0, %v418
    %v420 = vmul.f32 %v419, 2.0
    %v421 = vsub.f32 %v420, 1.0
    %v422 = vmul.f32 %v419, %v326
    %424 = vrot.lane.b32.xlu0 %v421, 64
    %v425 = vpop.permute.xlu0 %424
    %v427 = vmul.f32 %v419, %v425
    %429 = vrot.lane.b32.xlu0 %v427, 32
    %v430 = vpop.permute.xlu0 %429
    %v432 = vadd.f32 %v422, %v430
    %v433 = vtanh.pop %v432
    %435 = vrot.lane.b32.xlu0 %v433, 64
    %v436 = vpop.permute.xlu0 %435
    %v438 = vmul.f32 %v419, %v436
    %v439 = vadd.f32 %v152, %v407
    %v440 = vxor.u32 %v439, 2147483648
    %v441 = vmul.f32 %v440, 1.442695
    %v442 = vpow.pop %v441
    %v443 = vadd.f32 %v442, 1.0
    %v444 = vrcp.pop %v443
    %v445 = vmul.f32 1.0, %v444
    %v446 = vmul.f32 %v445, 2.0
    %v447 = vsub.f32 %v446, 1.0
    %v448 = vmul.f32 %v445, %v352
    %450 = vrot.lane.b32.xlu0 %v447, 64
    %v451 = vpop.permute.xlu0 %450
    %v453 = vmul.f32 %v445, %v451
    %455 = vrot.lane.b32.xlu0 %v453, 32
    %v456 = vpop.permute.xlu0 %455
    %v458 = vadd.f32 %v448, %v456
    %v459 = vtanh.pop %v458
    %461 = vrot.lane.b32.xlu0 %v459, 64
    %v462 = vpop.permute.xlu0 %461
    %v464 = vmul.f32 %v445, %v462
    %466 = vrot.lane.b32.xlu0 %v464, 32
    %v467 = vpop.permute.xlu0 %466
    %470 = vrot.lane.b32.xlu0 %v438, 64
    %v471 = vpop.permute.xlu0 %470
    %v473 = vsel %vm213, %v467, %v471
    %v474 = vpack.c.bf16 %v473, %v473
    %v476 = vsel %vm256, %v474, 0
    %478 = vmatprep.subr.bf16.mxu0 %v241
    %479 = vmatpush1.bf16.msra.mxu0 %v240
    %480 = vmatprep.subr.bf16.mxu0 %v243
    %481 = vmatpush1.bf16.msra.mxu0 %v242
    %482 = vmatprep.subr.bf16.mxu0 %v245
    %483 = vmatpush1.bf16.msra.mxu0 %v244
    %484 = vmatprep.subr.bf16.mxu0 %v247
    %485 = vmatpush1.bf16.msra.mxu0 %v246
    %486 = vmatprep.subr.bf16.mxu0 0
    %487 = vmatpush1.bf16.msra.mxu0 0
    %488 = vmatprep.subr.bf16.mxu0 0
    %489 = vmatpush1.bf16.msra.mxu0 0
    %490 = vmatprep.subr.bf16.mxu0 0
    %491 = vmatpush1.bf16.msra.mxu0 0
    %492 = vmatprep.subr.bf16.mxu0 0
    %493 = vmatpush1.bf16.msra.mxu0 0
    %494 = vmatprep.subr.bf16.mxu0 0
    %495 = vmatpush1.bf16.msra.mxu0 0
    %496 = vmatprep.subr.bf16.mxu0 0
    %497 = vmatpush1.bf16.msra.mxu0 0
    %498 = vmatprep.subr.bf16.mxu0 0
    %499 = vmatpush1.bf16.msra.mxu0 0
    %500 = vmatprep.subr.bf16.mxu0 0
    %501 = vmatpush1.bf16.msra.mxu0 0
    %502 = vmatprep.subr.bf16.mxu0 0
    %503 = vmatpush1.bf16.msra.mxu0 0
    %504 = vmatprep.subr.bf16.mxu0 0
    %505 = vmatpush1.bf16.msra.mxu0 0
    %506 = vmatprep.subr.bf16.mxu0 0
    %507 = vmatpush1.bf16.msra.mxu0 0
    %508 = vmatprep.subr.bf16.mxu0 0
    %509 = vmatpush1.bf16.msra.mxu0 0
    %510 = vmatprep.mubr.bf16.mxu0 0
    %511 = vmatmul.mubr.bf16.gmra.mrb[0].mxu0 %v476
    %v512 = vpop.f32.mrb[0].mxu0
    %v513 = vadd.f32 0.0, %v512
    %v514 = vpop.f32.mrb[0].mxu0
    %v515 = vadd.f32 0.0, %v514
    %v516 = vpop.f32.mrb[0].mxu0
    %v517 = vpop.f32.mrb[0].mxu0
    %518 = vdwg.mxu0
    %v519 = vadd.f32 %v515, %v305
    %v520 = vxor.u32 %v519, 2147483648
    %v521 = vmul.f32 %v520, 1.442695
    %v522 = vpow.pop %v521
    %v523 = vadd.f32 %v522, 1.0
    %v524 = vrcp.pop %v523
    %v525 = vmul.f32 1.0, %v524
    %v526 = vmul.f32 %v525, 2.0
    %v527 = vsub.f32 %v526, 1.0
    %v528 = vmul.f32 %v525, %v432
    %530 = vrot.lane.b32.xlu0 %v527, 64
    %v531 = vpop.permute.xlu0 %530
    %v533 = vmul.f32 %v525, %v531
    %535 = vrot.lane.b32.xlu0 %v533, 32
    %v536 = vpop.permute.xlu0 %535
    %v538 = vadd.f32 %v528, %v536
    %v539 = vtanh.pop %v538
    %541 = vrot.lane.b32.xlu0 %v539, 64
    %v542 = vpop.permute.xlu0 %541
    %v544 = vmul.f32 %v525, %v542
    %v545 = vadd.f32 %v155, %v513
    %v546 = vxor.u32 %v545, 2147483648
    %v547 = vmul.f32 %v546, 1.442695
    %v548 = vpow.pop %v547
    %v549 = vadd.f32 %v548, 1.0
    %v550 = vrcp.pop %v549
    %v551 = vmul.f32 1.0, %v550
    %v552 = vmul.f32 %v551, 2.0
    %v553 = vsub.f32 %v552, 1.0
    %v554 = vmul.f32 %v551, %v458
    %556 = vrot.lane.b32.xlu0 %v553, 64
    %v557 = vpop.permute.xlu0 %556
    %v559 = vmul.f32 %v551, %v557
    %561 = vrot.lane.b32.xlu0 %v559, 32
    %v562 = vpop.permute.xlu0 %561
    %v564 = vadd.f32 %v554, %v562
    %v565 = vtanh.pop %v564
    %567 = vrot.lane.b32.xlu0 %v565, 64
    %v568 = vpop.permute.xlu0 %567
    %v570 = vmul.f32 %v551, %v568
    %572 = vrot.lane.b32.xlu0 %v570, 32
    %v573 = vpop.permute.xlu0 %572
    %576 = vrot.lane.b32.xlu0 %v544, 64
    %v577 = vpop.permute.xlu0 %576
    %v579 = vsel %vm213, %v573, %v577
    %v580 = vpack.c.bf16 %v579, %v579
    %v582 = vsel %vm256, %v580, 0
    %584 = vmatprep.subr.bf16.mxu0 %v241
    %585 = vmatpush1.bf16.msra.mxu0 %v240
    %586 = vmatprep.subr.bf16.mxu0 %v243
    %587 = vmatpush1.bf16.msra.mxu0 %v242
    %588 = vmatprep.subr.bf16.mxu0 %v245
    %589 = vmatpush1.bf16.msra.mxu0 %v244
    %590 = vmatprep.subr.bf16.mxu0 %v247
    %591 = vmatpush1.bf16.msra.mxu0 %v246
    %592 = vmatprep.subr.bf16.mxu0 0
    %593 = vmatpush1.bf16.msra.mxu0 0
    %594 = vmatprep.subr.bf16.mxu0 0
    %595 = vmatpush1.bf16.msra.mxu0 0
    %596 = vmatprep.subr.bf16.mxu0 0
    %597 = vmatpush1.bf16.msra.mxu0 0
    %598 = vmatprep.subr.bf16.mxu0 0
    %599 = vmatpush1.bf16.msra.mxu0 0
    %600 = vmatprep.subr.bf16.mxu0 0
    %601 = vmatpush1.bf16.msra.mxu0 0
    %602 = vmatprep.subr.bf16.mxu0 0
    %603 = vmatpush1.bf16.msra.mxu0 0
    %604 = vmatprep.subr.bf16.mxu0 0
    %605 = vmatpush1.bf16.msra.mxu0 0
    %606 = vmatprep.subr.bf16.mxu0 0
    %607 = vmatpush1.bf16.msra.mxu0 0
    %608 = vmatprep.subr.bf16.mxu0 0
    %609 = vmatpush1.bf16.msra.mxu0 0
    %610 = vmatprep.subr.bf16.mxu0 0
    %611 = vmatpush1.bf16.msra.mxu0 0
    %612 = vmatprep.subr.bf16.mxu0 0
    %613 = vmatpush1.bf16.msra.mxu0 0
    %614 = vmatprep.subr.bf16.mxu0 0
    %615 = vmatpush1.bf16.msra.mxu0 0
    %616 = vmatprep.mubr.bf16.mxu0 0
    %617 = vmatmul.mubr.bf16.gmra.mrb[0].mxu0 %v582
    %v618 = vpop.f32.mrb[0].mxu0
    %v619 = vadd.f32 0.0, %v618
    %v620 = vpop.f32.mrb[0].mxu0
    %v621 = vadd.f32 0.0, %v620
    %v622 = vpop.f32.mrb[0].mxu0
    %v623 = vpop.f32.mrb[0].mxu0
    %624 = vdwg.mxu0
    %v625 = vadd.f32 %v621, %v305
    %v626 = vxor.u32 %v625, 2147483648
    %v627 = vmul.f32 %v626, 1.442695
    %v628 = vpow.pop %v627
    %v629 = vadd.f32 %v628, 1.0
    %v630 = vrcp.pop %v629
    %v631 = vmul.f32 1.0, %v630
    %v632 = vmul.f32 %v631, 2.0
    %v633 = vsub.f32 %v632, 1.0
    %v634 = vmul.f32 %v631, %v538
    %636 = vrot.lane.b32.xlu0 %v633, 64
    %v637 = vpop.permute.xlu0 %636
    %v639 = vmul.f32 %v631, %v637
    %641 = vrot.lane.b32.xlu0 %v639, 32
    %v642 = vpop.permute.xlu0 %641
    %v644 = vadd.f32 %v634, %v642
    %v645 = vtanh.pop %v644
    %647 = vrot.lane.b32.xlu0 %v645, 64
    %v648 = vpop.permute.xlu0 %647
    %v650 = vmul.f32 %v631, %v648
    %v651 = vadd.f32 %v160, %v619
    %v652 = vxor.u32 %v651, 2147483648
    %v653 = vmul.f32 %v652, 1.442695
    %v654 = vpow.pop %v653
    %v655 = vadd.f32 %v654, 1.0
    %v656 = vrcp.pop %v655
    %v657 = vmul.f32 1.0, %v656
    %v658 = vmul.f32 %v657, 2.0
    %v659 = vsub.f32 %v658, 1.0
    %v660 = vmul.f32 %v657, %v564
    %662 = vrot.lane.b32.xlu0 %v659, 64
    %v663 = vpop.permute.xlu0 %662
    %v665 = vmul.f32 %v657, %v663
    %667 = vrot.lane.b32.xlu0 %v665, 32
    %v668 = vpop.permute.xlu0 %667
    %v670 = vadd.f32 %v660, %v668
    %v671 = vtanh.pop %v670
    %673 = vrot.lane.b32.xlu0 %v671, 64
    %v674 = vpop.permute.xlu0 %673
    %v676 = vmul.f32 %v657, %v674
    %678 = vrot.lane.b32.xlu0 %v676, 32
    %v679 = vpop.permute.xlu0 %678
    %682 = vrot.lane.b32.xlu0 %v650, 64
    %v683 = vpop.permute.xlu0 %682
    %v685 = vsel %vm213, %v679, %v683
    %v686 = vpack.c.bf16 %v685, %v685
    %v688 = vsel %vm256, %v686, 0
    %690 = vmatprep.subr.bf16.mxu0 %v241
    %691 = vmatpush1.bf16.msra.mxu0 %v240
    %692 = vmatprep.subr.bf16.mxu0 %v243
    %693 = vmatpush1.bf16.msra.mxu0 %v242
    %694 = vmatprep.subr.bf16.mxu0 %v245
    %695 = vmatpush1.bf16.msra.mxu0 %v244
    %696 = vmatprep.subr.bf16.mxu0 %v247
    %697 = vmatpush1.bf16.msra.mxu0 %v246
    %698 = vmatprep.subr.bf16.mxu0 0
    %699 = vmatpush1.bf16.msra.mxu0 0
    %700 = vmatprep.subr.bf16.mxu0 0
    %701 = vmatpush1.bf16.msra.mxu0 0
    %702 = vmatprep.subr.bf16.mxu0 0
    %703 = vmatpush1.bf16.msra.mxu0 0
    %704 = vmatprep.subr.bf16.mxu0 0
    %705 = vmatpush1.bf16.msra.mxu0 0
    %706 = vmatprep.subr.bf16.mxu0 0
    %707 = vmatpush1.bf16.msra.mxu0 0
    %708 = vmatprep.subr.bf16.mxu0 0
    %709 = vmatpush1.bf16.msra.mxu0 0
    %710 = vmatprep.subr.bf16.mxu0 0
    %711 = vmatpush1.bf16.msra.mxu0 0
    %712 = vmatprep.subr.bf16.mxu0 0
    %713 = vmatpush1.bf16.msra.mxu0 0
    %714 = vmatprep.subr.bf16.mxu0 0
    %715 = vmatpush1.bf16.msra.mxu0 0
    %716 = vmatprep.subr.bf16.mxu0 0
    %717 = vmatpush1.bf16.msra.mxu0 0
    %718 = vmatprep.subr.bf16.mxu0 0
    %719 = vmatpush1.bf16.msra.mxu0 0
    %720 = vmatprep.subr.bf16.mxu0 0
    %721 = vmatpush1.bf16.msra.mxu0 0
    %722 = vmatprep.mubr.bf16.mxu0 0
    %723 = vmatmul.mubr.bf16.gmra.mrb[0].mxu0 %v688
    %v724 = vpop.f32.mrb[0].mxu0
    %v725 = vadd.f32 0.0, %v724
    %v726 = vpop.f32.mrb[0].mxu0
    %v727 = vadd.f32 0.0, %v726
    %v728 = vpop.f32.mrb[0].mxu0
    %v729 = vpop.f32.mrb[0].mxu0
    %730 = vdwg.mxu0
    %v731 = vadd.f32 %v727, %v305
    %v732 = vxor.u32 %v731, 2147483648
    %v733 = vmul.f32 %v732, 1.442695
    %v734 = vpow.pop %v733
    %v735 = vadd.f32 %v734, 1.0
    %v736 = vrcp.pop %v735
    %v737 = vmul.f32 1.0, %v736
    %v738 = vmul.f32 %v737, 2.0
    %v739 = vsub.f32 %v738, 1.0
    %v740 = vmul.f32 %v737, %v644
    %742 = vrot.lane.b32.xlu0 %v739, 64
    %v743 = vpop.permute.xlu0 %742
    %v745 = vmul.f32 %v737, %v743
    %747 = vrot.lane.b32.xlu0 %v745, 32
    %v748 = vpop.permute.xlu0 %747
    %v750 = vadd.f32 %v740, %v748
    %v751 = vtanh.pop %v750
    %753 = vrot.lane.b32.xlu0 %v751, 64
    %v754 = vpop.permute.xlu0 %753
    %v756 = vmul.f32 %v737, %v754
    %v757 = vadd.f32 %v163, %v725
    %v758 = vxor.u32 %v757, 2147483648
    %v759 = vmul.f32 %v758, 1.442695
    %v760 = vpow.pop %v759
    %v761 = vadd.f32 %v760, 1.0
    %v762 = vrcp.pop %v761
    %v763 = vmul.f32 1.0, %v762
    %v764 = vmul.f32 %v763, 2.0
    %v765 = vsub.f32 %v764, 1.0
    %v766 = vmul.f32 %v763, %v670
    %768 = vrot.lane.b32.xlu0 %v765, 64
    %v769 = vpop.permute.xlu0 %768
    %v771 = vmul.f32 %v763, %v769
    %773 = vrot.lane.b32.xlu0 %v771, 32
    %v774 = vpop.permute.xlu0 %773
    %v776 = vadd.f32 %v766, %v774
    %v777 = vtanh.pop %v776
    %779 = vrot.lane.b32.xlu0 %v777, 64
    %v780 = vpop.permute.xlu0 %779
    %v782 = vmul.f32 %v763, %v780
    %784 = vrot.lane.b32.xlu0 %v782, 32
    %v785 = vpop.permute.xlu0 %784
    %788 = vrot.lane.b32.xlu0 %v756, 64
    %v789 = vpop.permute.xlu0 %788
    %v791 = vsel %vm213, %v785, %v789
    %v792 = vpack.c.bf16 %v791, %v791
    %v794 = vsel %vm256, %v792, 0
    %796 = vmatprep.subr.bf16.mxu0 %v241
    %797 = vmatpush1.bf16.msra.mxu0 %v240
    %798 = vmatprep.subr.bf16.mxu0 %v243
    %799 = vmatpush1.bf16.msra.mxu0 %v242
    %800 = vmatprep.subr.bf16.mxu0 %v245
    %801 = vmatpush1.bf16.msra.mxu0 %v244
    %802 = vmatprep.subr.bf16.mxu0 %v247
    %803 = vmatpush1.bf16.msra.mxu0 %v246
    %804 = vmatprep.subr.bf16.mxu0 0
    %805 = vmatpush1.bf16.msra.mxu0 0
    %806 = vmatprep.subr.bf16.mxu0 0
    %807 = vmatpush1.bf16.msra.mxu0 0
    %808 = vmatprep.subr.bf16.mxu0 0
    %809 = vmatpush1.bf16.msra.mxu0 0
    %810 = vmatprep.subr.bf16.mxu0 0
    %811 = vmatpush1.bf16.msra.mxu0 0
    %812 = vmatprep.subr.bf16.mxu0 0
    %813 = vmatpush1.bf16.msra.mxu0 0
    %814 = vmatprep.subr.bf16.mxu0 0
    %815 = vmatpush1.bf16.msra.mxu0 0
    %816 = vmatprep.subr.bf16.mxu0 0
    %817 = vmatpush1.bf16.msra.mxu0 0
    %818 = vmatprep.subr.bf16.mxu0 0
    %819 = vmatpush1.bf16.msra.mxu0 0
    %820 = vmatprep.subr.bf16.mxu0 0
    %821 = vmatpush1.bf16.msra.mxu0 0
    %822 = vmatprep.subr.bf16.mxu0 0
    %823 = vmatpush1.bf16.msra.mxu0 0
    %824 = vmatprep.subr.bf16.mxu0 0
    %825 = vmatpush1.bf16.msra.mxu0 0
    %826 = vmatprep.subr.bf16.mxu0 0
    %827 = vmatpush1.bf16.msra.mxu0 0
    %828 = vmatprep.mubr.bf16.mxu0 0
    %829 = vmatmul.mubr.bf16.gmra.mrb[0].mxu0 %v794
    %v830 = vpop.f32.mrb[0].mxu0
    %v831 = vadd.f32 0.0, %v830
    %v832 = vpop.f32.mrb[0].mxu0
    %v833 = vadd.f32 0.0, %v832
    %v834 = vpop.f32.mrb[0].mxu0
    %v835 = vpop.f32.mrb[0].mxu0
    %836 = vdwg.mxu0
    %v837 = vadd.f32 %v833, %v305
    %v838 = vxor.u32 %v837, 2147483648
    %v839 = vmul.f32 %v838, 1.442695
    %v840 = vpow.pop %v839
    %v841 = vadd.f32 %v840, 1.0
    %v842 = vrcp.pop %v841
    %v843 = vmul.f32 1.0, %v842
    %v844 = vmul.f32 %v843, 2.0
    %v845 = vsub.f32 %v844, 1.0
    %v846 = vmul.f32 %v843, %v750
    %848 = vrot.lane.b32.xlu0 %v845, 64
    %v849 = vpop.permute.xlu0 %848
    %v851 = vmul.f32 %v843, %v849
    %853 = vrot.lane.b32.xlu0 %v851, 32
    %v854 = vpop.permute.xlu0 %853
    %v856 = vadd.f32 %v846, %v854
    %v857 = vtanh.pop %v856
    %859 = vrot.lane.b32.xlu0 %v857, 64
    %v860 = vpop.permute.xlu0 %859
    %v862 = vmul.f32 %v843, %v860
    %v863 = vadd.f32 %v168, %v831
    %v864 = vxor.u32 %v863, 2147483648
    %v865 = vmul.f32 %v864, 1.442695
    %v866 = vpow.pop %v865
    %v867 = vadd.f32 %v866, 1.0
    %v868 = vrcp.pop %v867
    %v869 = vmul.f32 1.0, %v868
    %v870 = vmul.f32 %v869, 2.0
    %v871 = vsub.f32 %v870, 1.0
    %v872 = vmul.f32 %v869, %v776
    %874 = vrot.lane.b32.xlu0 %v871, 64
    %v875 = vpop.permute.xlu0 %874
    %v877 = vmul.f32 %v869, %v875
    %879 = vrot.lane.b32.xlu0 %v877, 32
    %v880 = vpop.permute.xlu0 %879
    %v882 = vadd.f32 %v872, %v880
    %v883 = vtanh.pop %v882
    %885 = vrot.lane.b32.xlu0 %v883, 64
    %v886 = vpop.permute.xlu0 %885
    %v888 = vmul.f32 %v869, %v886
    %890 = vrot.lane.b32.xlu0 %v888, 32
    %v891 = vpop.permute.xlu0 %890
    %894 = vrot.lane.b32.xlu0 %v862, 64
    %v895 = vpop.permute.xlu0 %894
    %v897 = vsel %vm213, %v891, %v895
    %v898 = vpack.c.bf16 %v897, %v897
    %v900 = vsel %vm256, %v898, 0
    %902 = vmatprep.subr.bf16.mxu0 %v241
    %903 = vmatpush1.bf16.msra.mxu0 %v240
    %904 = vmatprep.subr.bf16.mxu0 %v243
    %905 = vmatpush1.bf16.msra.mxu0 %v242
    %906 = vmatprep.subr.bf16.mxu0 %v245
    %907 = vmatpush1.bf16.msra.mxu0 %v244
    %908 = vmatprep.subr.bf16.mxu0 %v247
    %909 = vmatpush1.bf16.msra.mxu0 %v246
    %910 = vmatprep.subr.bf16.mxu0 0
    %911 = vmatpush1.bf16.msra.mxu0 0
    %912 = vmatprep.subr.bf16.mxu0 0
    %913 = vmatpush1.bf16.msra.mxu0 0
    %914 = vmatprep.subr.bf16.mxu0 0
    %915 = vmatpush1.bf16.msra.mxu0 0
    %916 = vmatprep.subr.bf16.mxu0 0
    %917 = vmatpush1.bf16.msra.mxu0 0
    %918 = vmatprep.subr.bf16.mxu0 0
    %919 = vmatpush1.bf16.msra.mxu0 0
    %920 = vmatprep.subr.bf16.mxu0 0
    %921 = vmatpush1.bf16.msra.mxu0 0
    %922 = vmatprep.subr.bf16.mxu0 0
    %923 = vmatpush1.bf16.msra.mxu0 0
    %924 = vmatprep.subr.bf16.mxu0 0
    %925 = vmatpush1.bf16.msra.mxu0 0
    %926 = vmatprep.subr.bf16.mxu0 0
    %927 = vmatpush1.bf16.msra.mxu0 0
    %928 = vmatprep.subr.bf16.mxu0 0
    %929 = vmatpush1.bf16.msra.mxu0 0
    %930 = vmatprep.subr.bf16.mxu0 0
    %931 = vmatpush1.bf16.msra.mxu0 0
    %932 = vmatprep.subr.bf16.mxu0 0
    %933 = vmatpush1.bf16.msra.mxu0 0
    %934 = vmatprep.mubr.bf16.mxu0 0
    %935 = vmatmul.mubr.bf16.gmra.mrb[0].mxu0 %v900
    %v936 = vpop.f32.mrb[0].mxu0
    %v937 = vadd.f32 0.0, %v936
    %v938 = vpop.f32.mrb[0].mxu0
    %v939 = vadd.f32 0.0, %v938
    %v940 = vpop.f32.mrb[0].mxu0
    %v941 = vpop.f32.mrb[0].mxu0
    %942 = vdwg.mxu0
    %v943 = vadd.f32 %v939, %v305
    %v944 = vxor.u32 %v943, 2147483648
    %v945 = vmul.f32 %v944, 1.442695
    %v946 = vpow.pop %v945
    %v947 = vadd.f32 %v946, 1.0
    %v948 = vrcp.pop %v947
    %v949 = vmul.f32 1.0, %v948
    %v950 = vmul.f32 %v949, 2.0
    %v951 = vsub.f32 %v950, 1.0
    %v952 = vmul.f32 %v949, %v856
    %954 = vrot.lane.b32.xlu0 %v951, 64
    %v955 = vpop.permute.xlu0 %954
    %v957 = vmul.f32 %v949, %v955
    %959 = vrot.lane.b32.xlu0 %v957, 32
    %v960 = vpop.permute.xlu0 %959
    %v962 = vadd.f32 %v952, %v960
    %v963 = vtanh.pop %v962
    %965 = vrot.lane.b32.xlu0 %v963, 64
    %v966 = vpop.permute.xlu0 %965
    %v968 = vmul.f32 %v949, %v966
    %v969 = vadd.f32 %v171, %v937
    %v970 = vxor.u32 %v969, 2147483648
    %v971 = vmul.f32 %v970, 1.442695
    %v972 = vpow.pop %v971
    %v973 = vadd.f32 %v972, 1.0
    %v974 = vrcp.pop %v973
    %v975 = vmul.f32 1.0, %v974
    %v976 = vmul.f32 %v975, 2.0
    %v977 = vsub.f32 %v976, 1.0
    %v978 = vmul.f32 %v975, %v882
    %980 = vrot.lane.b32.xlu0 %v977, 64
    %v981 = vpop.permute.xlu0 %980
    %v983 = vmul.f32 %v975, %v981
    %985 = vrot.lane.b32.xlu0 %v983, 32
    %v986 = vpop.permute.xlu0 %985
    %v988 = vadd.f32 %v978, %v986
    %v989 = vtanh.pop %v988
    %991 = vrot.lane.b32.xlu0 %v989, 64
    %v992 = vpop.permute.xlu0 %991
    %v994 = vmul.f32 %v975, %v992
    %996 = vrot.lane.b32.xlu0 %v994, 32
    %v997 = vpop.permute.xlu0 %996
    %1000 = vrot.lane.b32.xlu0 %v968, 64
    %v1001 = vpop.permute.xlu0 %1000
    %v1003 = vsel %vm213, %v997, %v1001
    %v1004 = vpack.c.bf16 %v1003, %v1003
    %v1006 = vsel %vm256, %v1004, 0
    %1008 = vmatprep.subr.bf16.mxu0 %v241
    %1009 = vmatpush1.bf16.msra.mxu0 %v240
    %1010 = vmatprep.subr.bf16.mxu0 %v243
    %1011 = vmatpush1.bf16.msra.mxu0 %v242
    %1012 = vmatprep.subr.bf16.mxu0 %v245
    %1013 = vmatpush1.bf16.msra.mxu0 %v244
    %1014 = vmatprep.subr.bf16.mxu0 %v247
    %1015 = vmatpush1.bf16.msra.mxu0 %v246
    %1016 = vmatprep.subr.bf16.mxu0 0
    %1017 = vmatpush1.bf16.msra.mxu0 0
    %1018 = vmatprep.subr.bf16.mxu0 0
    %1019 = vmatpush1.bf16.msra.mxu0 0
    %1020 = vmatprep.subr.bf16.mxu0 0
    %1021 = vmatpush1.bf16.msra.mxu0 0
    %1022 = vmatprep.subr.bf16.mxu0 0
    %1023 = vmatpush1.bf16.msra.mxu0 0
    %1024 = vmatprep.subr.bf16.mxu0 0
    %1025 = vmatpush1.bf16.msra.mxu0 0
    %1026 = vmatprep.subr.bf16.mxu0 0
    %1027 = vmatpush1.bf16.msra.mxu0 0
    %1028 = vmatprep.subr.bf16.mxu0 0
    %1029 = vmatpush1.bf16.msra.mxu0 0
    %1030 = vmatprep.subr.bf16.mxu0 0
    %1031 = vmatpush1.bf16.msra.mxu0 0
    %1032 = vmatprep.subr.bf16.mxu0 0
    %1033 = vmatpush1.bf16.msra.mxu0 0
    %1034 = vmatprep.subr.bf16.mxu0 0
    %1035 = vmatpush1.bf16.msra.mxu0 0
    %1036 = vmatprep.subr.bf16.mxu0 0
    %1037 = vmatpush1.bf16.msra.mxu0 0
    %1038 = vmatprep.subr.bf16.mxu0 0
    %1039 = vmatpush1.bf16.msra.mxu0 0
    %1040 = vmatprep.mubr.bf16.mxu0 0
    %1041 = vmatmul.mubr.bf16.gmra.mrb[0].mxu0 %v1006
    %v1042 = vpop.f32.mrb[0].mxu0
    %v1043 = vpop.f32.mrb[0].mxu0
    %v1044 = vadd.f32 0.0, %v1043
    %v1045 = vpop.f32.mrb[0].mxu0
    %v1046 = vpop.f32.mrb[0].mxu0
    %1047 = vdwg.mxu0
    %v1048 = vadd.f32 %v1044, %v305
    %v1049 = vxor.u32 %v1048, 2147483648
    %v1050 = vmul.f32 %v1049, 1.442695
    %v1051 = vpow.pop %v1050
    %v1052 = vadd.f32 %v1051, 1.0
    %v1053 = vrcp.pop %v1052
    %v1054 = vmul.f32 1.0, %v1053
    %v1055 = vmul.f32 %v1054, 2.0
    %v1056 = vsub.f32 %v1055, 1.0
    %v1057 = vmul.f32 %v1054, %v962
    %1059 = vrot.lane.b32.xlu0 %v1056, 64
    %v1060 = vpop.permute.xlu0 %1059
    %v1062 = vmul.f32 %v1054, %v1060
    %1064 = vrot.lane.b32.xlu0 %v1062, 32
    %v1065 = vpop.permute.xlu0 %1064
    %v1067 = vadd.f32 %v1057, %v1065
    %v1068 = vtanh.pop %v1067
    %1070 = vrot.lane.b32.xlu0 %v1068, 64
    %v1071 = vpop.permute.xlu0 %1070
    %v1073 = vmul.f32 %v1054, %v1071
    %v1074 = vld [vmem:[%s5] sm:$0xff]
    %v1075 = vld [vmem:[%s5 + $0x8] sm:$0xff]
    %v1076 = vld [vmem:[%s5 + $0x10] sm:$0xff]
    %v1077 = vld [vmem:[%s5 + $0x18] sm:$0xff]
    %v1078 = vld [vmem:[#allocation4] sm:$0x1]
    %v1080 = vlaneseq
    %v1081 = vshrl.u32 %v1080, 7
    %v1082 = vsub.s32 0, %v1081
    %v1083 = vrot.slane %v1078, %v1082
    %1086 = vrot.lane.b32.xlu0 %v1073, 32
    %v1087 = vpop.permute.xlu0 %1086
    %v1088 = vsel %vm213, %v1087, 0
    %1090 = vmatprep.subr.mxu0 0.0
    %1091 = vmatpush1.msra.mxu0 %v1074
    %1092 = vmatprep.subr.mxu0 0.0
    %1093 = vmatpush1.msra.mxu0 %v1075
    %1094 = vmatprep.subr.mxu0 0.0
    %1095 = vmatpush1.msra.mxu0 %v1076
    %1096 = vmatprep.subr.mxu0 0.0
    %1097 = vmatpush1.msra.mxu0 %v1077
    %1098 = vmatprep.subr.mxu0 0.0
    %1099 = vmatpush1.msra.mxu0 0.0
    %1100 = vmatprep.subr.mxu0 0.0
    %1101 = vmatpush1.msra.mxu0 0.0
    %1102 = vmatprep.subr.mxu0 0.0
    %1103 = vmatpush1.msra.mxu0 0.0
    %1104 = vmatprep.subr.mxu0 0.0
    %1105 = vmatpush1.msra.mxu0 0.0
    %1106 = vmatprep.subr.mxu0 0.0
    %1107 = vmatpush1.msra.mxu0 0.0
    %1108 = vmatprep.subr.mxu0 0.0
    %1109 = vmatpush1.msra.mxu0 0.0
    %1110 = vmatprep.subr.mxu0 0.0
    %1111 = vmatpush1.msra.mxu0 0.0
    %1112 = vmatprep.subr.mxu0 0.0
    %1113 = vmatpush1.msra.mxu0 0.0
    %1114 = vmatprep.subr.mxu0 0.0
    %1115 = vmatpush1.msra.mxu0 0.0
    %1116 = vmatprep.subr.mxu0 0.0
    %1117 = vmatpush1.msra.mxu0 0.0
    %1118 = vmatprep.subr.mxu0 0.0
    %1119 = vmatpush1.msra.mxu0 0.0
    %1120 = vmatprep.subr.mxu0 0.0
    %1121 = vmatpush1.msra.mxu0 0.0
    %1122 = vmatprep.subr.mxu0 0.0
    %1123 = vmatpush1.msra.mxu0 0.0
    %1124 = vmatprep.subr.mxu0 0.0
    %1125 = vmatpush1.msra.mxu0 0.0
    %1126 = vmatprep.subr.mxu0 0.0
    %1127 = vmatpush1.msra.mxu0 0.0
    %1128 = vmatprep.subr.mxu0 0.0
    %1129 = vmatpush1.msra.mxu0 0.0
    %1130 = vmatprep.subr.mxu0 0.0
    %1131 = vmatpush1.msra.mxu0 0.0
    %1132 = vmatprep.subr.mxu0 0.0
    %1133 = vmatpush1.msra.mxu0 0.0
    %1134 = vmatprep.subr.mxu0 0.0
    %1135 = vmatpush1.msra.mxu0 0.0
    %1136 = vmatprep.subr.mxu0 0.0
    %1137 = vmatpush1.msra.mxu0 0.0
    %1138 = vmatprep.subr.mxu0 0.0
    %1139 = vmatpush1.msra.mxu0 0.0
    %1140 = vmatprep.subr.mxu0 0.0
    %1141 = vmatpush1.msra.mxu0 0.0
    %1142 = vmatprep.subr.mxu0 0.0
    %1143 = vmatpush1.msra.mxu0 0.0
    %1144 = vmatprep.subr.mxu0 0.0
    %1145 = vmatpush1.msra.mxu0 0.0
    %1146 = vmatprep.subr.mxu0 0.0
    %1147 = vmatpush1.msra.mxu0 0.0
    %1148 = vmatprep.subr.mxu0 0.0
    %1149 = vmatpush1.msra.mxu0 0.0
    %1150 = vmatprep.subr.mxu0 0.0
    %1151 = vmatpush1.msra.mxu0 0.0
    %1152 = vmatprep.subr.mxu0 0.0
    %1153 = vmatpush1.msra.mxu0 0.0
    %1154 = vmatprep.mubr.f32.mxu0 0.0
    %1155 = vmatmul.mubr.f32.gmra.mrb[0].mxu0 %v1088
    %v1156 = vpop.f32.mrb[0].mxu0
    %v1157 = vadd.f32 %v1083, %v1156
    %v1158 = vpop.f32.mrb[0].mxu0
    %1159 = vdwg.mxu0
    %1160 = vst [vmem:[%s7] sm:$0xff] %v1157
    // Predicated region
    $region38: #{lstm_forward.1} parent=1 // pred_check
      _
    $region39: #{lstm_forward.1} parent=1 // pred_check_branch
      %1162 = sbr.rel (0) target = $region41
    $region40: #{lstm_forward.1} parent=1 // pred_region
      _
    $region41: #{lstm_forward.1} parent=1 // pred_fallthru
      _
    // Predicated region
    $region42: #{lstm_forward.1} parent=1 // pred_check
      _
    $region43: #{lstm_forward.1} parent=1 // pred_check_branch
      %1164 = sbr.rel (0) target = $region45
    $region44: #{lstm_forward.1} parent=1 // pred_region
      _
    $region45: #{lstm_forward.1} parent=1 // pred_fallthru
      _
    %1165 = vsyncpa [#allocation3], 1
    %1166 = vsyncpa [#allocation5], 1

</llo_original>
